<compile_context>
chip_gen: v7x
topology: tpu7x:2x2x1
jax: 0.10.0
libtpu: 0.0.40
codegen_flags: <defaults>
</compile_context>

<pallas_src>
import functools

import jax
import jax.numpy as jnp
from jax import lax
from jax.experimental import pallas as pl
from jax.experimental.pallas import tpu as pltpu

EPS = 1e-5
_VMEM_LIMIT = 48 << 20          # raise scoped VMEM (v5e default is only 16 MiB)
_MAX_TP = 16384                 # v7x VMEM cap: 2x(~960 B/pos)*tp must stay < 64 MiB


def _nt(a, b):
    # (C, tp) x (C, tp) -> (C, C) contraction over positions (A @ B^T, "NT" form,
    # expressed directly as dot_general so no explicit transpose is materialized).
    return lax.dot_general(a, b, (((1,), (1,)), ((), ())),
                           preferred_element_type=jnp.float32)


# ---------------------------------------------------------------- kernels ---
def _make_pass1_kernel(P, tp, nT, nP, needs_mask):
    # x: (Cin, tp), r(=x72): (Cmid, tp), w1: (Cmid, Cin)
    # outputs: y (bf16, (Cmid, tp)), per-core stat slots:
    #   sy/sx: (Cmid, 1), gyy/gyx/gxx: (Cmid, Cmid)
    def kernel(x_ref, r_ref, w1_ref,
               y_ref, sy_ref, sx_ref, gyy_ref, gyx_ref, gxx_ref):
        c = pl.program_id(0)          # core slot ("parallel" axis)
        i = pl.program_id(1)          # position-tile within this core ("arbitrary")
        t = c * nT + i                # linear position-tile id in [0, nP)

        y32 = jnp.dot(w1_ref[...], x_ref[...], preferred_element_type=jnp.float32)

        @pl.when(i == 0)
        def _init():
            sy_ref[...] = jnp.zeros_like(sy_ref)
            sx_ref[...] = jnp.zeros_like(sx_ref)
            gyy_ref[...] = jnp.zeros_like(gyy_ref)
            gyx_ref[...] = jnp.zeros_like(gyx_ref)
            gxx_ref[...] = jnp.zeros_like(gxx_ref)

        def store_and_accum(ybf, xv):
            y_ref[...] = ybf
            yv = ybf.astype(jnp.float32)     # stats consistent with staged bf16
            sy_ref[...] += jnp.sum(yv, axis=1, keepdims=True)
            sx_ref[...] += jnp.sum(xv, axis=1, keepdims=True)
            gyy_ref[...] += _nt(yv, yv)
            gyx_ref[...] += _nt(yv, xv)
            gxx_ref[...] += _nt(xv, xv)

        if needs_mask:
            # Only the last tile is partial -> keep an unmasked fast path for
            # every interior tile; zero padded columns (data + stats) on the last.
            @pl.when(t == nP - 1)
            def _():
                col = (nP - 1) * tp + lax.broadcasted_iota(jnp.int32, y32.shape, 1)
                m = col < P
                store_and_accum(jnp.where(m, y32, 0.0).astype(jnp.bfloat16),
                                jnp.where(m, r_ref[...], 0.0))

            @pl.when(t != nP - 1)
            def _():
                store_and_accum(y32.astype(jnp.bfloat16), r_ref[...])
        else:
            store_and_accum(y32.astype(jnp.bfloat16), r_ref[...])

    return kernel


def _pass2_kernel(y_ref, r_ref, w2_ref, a1_ref, c1_ref, a2_ref, c2_ref, o_ref):
    # Normalize pass: h = a1*y + c1 + x72 ; out = a2*(W2 @ h) + c2.
    # No accumulators -> grid axis is "parallel" (both TCs on v7x).
    h = y_ref[...].astype(jnp.float32) * a1_ref[...] + c1_ref[...] + r_ref[...]
    z = jnp.dot(w2_ref[...], h, preferred_element_type=jnp.float32)
    o_ref[...] = (z * a2_ref[...] + c2_ref[...]).astype(o_ref.dtype)


# ---------------------------------------------------------------- wrapper ---
def fused_forward(x84, x72, w1, g1, b1, w2, g2, b2, *, block_p=8192):
    """
    x84: (N, 192, H, W) f32      x72: (N, 32, H, W) f32
    w1 : (32, 192)  conv2d28 weight (out_ch, in_ch), no bias
    w2 : (192, 32)  conv2d29 weight (out_ch, in_ch), no bias
    g1, b1: (32,)   BN1 gamma/beta     g2, b2: (192,)  BN2 gamma/beta
    returns: (N, 192, H, W) f32
    """
    assert block_p % 128 == 0
    N, C_in, H, W = x84.shape
    C_mid = x72.shape[1]
    P = N * H * W

    # NCHW -> (C, P).  For N == 1 this folds to a reshape.
    # TODO(synk): for N > 1, index NCHW directly with an (n, p-tile) grid instead
    # of materializing wrapper transposes.
    x84_m = jnp.transpose(x84.reshape(N, C_in, H * W), (1, 0, 2)).reshape(C_in, P)
    x72_m = jnp.transpose(x72.reshape(N, C_mid, H * W), (1, 0, 2)).reshape(C_mid, P)

    max_tp = min(block_p, _MAX_TP)
    tp = P if P <= max_tp else max_tp
    nP = pl.cdiv(P, tp)
    needs_mask = (P % tp) != 0

    # Megacore split of the stats pass: 2 core slots when the tile count splits
    # evenly (exact split, no duplicated tiles); otherwise a single slot.
    NC = 2 if (nP % 2 == 0 and nP >= 2) else 1
    nT = nP // NC

    w1f = w1.astype(jnp.float32)
    w2f = w2.astype(jnp.float32)

    # ---- pass 1: y = W1 @ x84 (bf16 staging) + all BN statistics -------------
    y_st, sy, sx, gyy, gyx, gxx = pl.pallas_call(
        _make_pass1_kernel(P, tp, nT, nP, needs_mask),
        grid=(NC, nT),
        in_specs=[
            pl.BlockSpec((C_in, tp), lambda c, i: (0, c * nT + i)),
            pl.BlockSpec((C_mid, tp), lambda c, i: (0, c * nT + i)),
            pl.BlockSpec((C_mid, C_in), lambda c, i: (0, 0)),
        ],
        out_specs=(
            pl.BlockSpec((C_mid, tp), lambda c, i: (0, c * nT + i)),
            pl.BlockSpec((C_mid, 1), lambda c, i: (c, 0)),
            pl.BlockSpec((C_mid, 1), lambda c, i: (c, 0)),
            pl.BlockSpec((C_mid, C_mid), lambda c, i: (c, 0)),
            pl.BlockSpec((C_mid, C_mid), lambda c, i: (c, 0)),
            pl.BlockSpec((C_mid, C_mid), lambda c, i: (c, 0)),
        ),
        out_shape=(
            jax.ShapeDtypeStruct((C_mid, P), jnp.bfloat16),
            jax.ShapeDtypeStruct((NC * C_mid, 1), jnp.float32),
            jax.ShapeDtypeStruct((NC * C_mid, 1), jnp.float32),
            jax.ShapeDtypeStruct((NC * C_mid, C_mid), jnp.float32),
            jax.ShapeDtypeStruct((NC * C_mid, C_mid), jnp.float32),
            jax.ShapeDtypeStruct((NC * C_mid, C_mid), jnp.float32),
        ),
        compiler_params=pltpu.CompilerParams(
            dimension_semantics=("parallel", "arbitrary"),
            vmem_limit_bytes=_VMEM_LIMIT),
    )(x84_m, x72_m, w1f)

    # Reduce per-core partials.
    sy = jnp.sum(sy.reshape(NC, C_mid, 1), axis=0)
    sx = jnp.sum(sx.reshape(NC, C_mid, 1), axis=0)
    gyy = jnp.sum(gyy.reshape(NC, C_mid, C_mid), axis=0)
    gyx = jnp.sum(gyx.reshape(NC, C_mid, C_mid), axis=0)
    gxx = jnp.sum(gxx.reshape(NC, C_mid, C_mid), axis=0)

    inv_p = 1.0 / P
    # ---- BN1 affine:  bn1(y) = a1*y + c1 -------------------------------------
    mean1 = sy * inv_p
    var1 = jnp.maximum(jnp.diagonal(gyy)[:, None] * inv_p - mean1 * mean1, 0.0)
    a1 = g1.reshape(C_mid, 1).astype(jnp.float32) * lax.rsqrt(var1 + EPS)
    c1 = b1.reshape(C_mid, 1).astype(jnp.float32) - mean1 * a1

    # ---- BN2 stats recovered from the Grams (h = a1*y + c1 + x72, z = W2 h) ---
    sh = a1 * sy + P * c1 + sx                      # sum_p h_p           (Cmid,1)
    asy = a1 * sy
    dgyx = a1 * gyx                                  # D * Gyx (row-scaled)
    ghh = ((a1 * a1.T) * gyy + dgyx + dgyx.T
           + asy @ c1.T + c1 @ asy.T
           + c1 @ sx.T + sx @ c1.T
           + P * (c1 @ c1.T) + gxx)                  # sum_p h_p h_p^T   (Cmid,Cmid)

    sz = w2f @ sh                                    # sum_p z_p          (Cin,1)
    mean2 = sz * inv_p
    zz = jnp.sum((w2f @ ghh) * w2f, axis=1, keepdims=True)  # diag(W2 Ghh W2^T)
    var2 = jnp.maximum(zz * inv_p - mean2 * mean2, 0.0)
    a2 = g2.reshape(C_in, 1).astype(jnp.float32) * lax.rsqrt(var2 + EPS)
    c2 = b2.reshape(C_in, 1).astype(jnp.float32) - mean2 * a2

    # ---- pass 2: normalize + write output (parallel over P tiles) ------------
    out_m = pl.pallas_call(
        _pass2_kernel,
        grid=(nP,),
        in_specs=[
            pl.BlockSpec((C_mid, tp), lambda i: (0, i)),
            pl.BlockSpec((C_mid, tp), lambda i: (0, i)),
            pl.BlockSpec((C_in, C_mid), lambda i: (0, 0)),
            pl.BlockSpec((C_mid, 1), lambda i: (0, 0)),
            pl.BlockSpec((C_mid, 1), lambda i: (0, 0)),
            pl.BlockSpec((C_in, 1), lambda i: (0, 0)),
            pl.BlockSpec((C_in, 1), lambda i: (0, 0)),
        ],
        out_specs=pl.BlockSpec((C_in, tp), lambda i: (0, i)),
        out_shape=jax.ShapeDtypeStruct((C_in, P), jnp.float32),
        compiler_params=pltpu.CompilerParams(
            dimension_semantics=("parallel",),
            vmem_limit_bytes=_VMEM_LIMIT),
    )(y_st, x72_m, w2f, a1, c1, a2, c2)

    # (C, P) -> NCHW
    return jnp.transpose(out_m.reshape(C_in, N, H, W), (1, 0, 2, 3))


# ------------------------------------------------------------- reference ----
def _reference(x84, x72, w1, g1, b1, w2, g2, b2):
    def conv1x1(x, w):
        return jnp.einsum("nchw,oc->nohw", x, w)

    def bn(x, g, b):
        m = jnp.mean(x, axis=(0, 2, 3), keepdims=True)
        v = jnp.mean((x - m) ** 2, axis=(0, 2, 3), keepdims=True)
        return (x - m) * lax.rsqrt(v + EPS) * g.reshape(1, -1, 1, 1) + b.reshape(1, -1, 1, 1)

    h = bn(conv1x1(x84, w1), g1, b1) + x72
    return bn(conv1x1(h, w2), g2, b2)


if __name__ == "__main__":
    # Small shapes consistent with the module: keep the channel structure
    # (192 -> 32 -> 192), shrink spatial to 16x12 (P=192), batch 1.
    N, C_in, C_mid, H, W = 1, 192, 32, 16, 12

    key = jax.random.PRNGKey(0)
    k1, k2, k3, k4, k5, k6, k7, k8 = jax.random.split(key, 8)

    x84 = jax.random.normal(k1, (N, C_in, H, W), jnp.float32)
    x72 = jax.random.normal(k2, (N, C_mid, H, W), jnp.float32)

    w1 = jax.random.normal(k3, (C_mid, C_in), jnp.float32) * 0.05   # conv2d28 (out,in)
    w2 = jax.random.normal(k4, (C_in, C_mid), jnp.float32) * 0.05   # conv2d29 (out,in)
    g1 = 1.0 + 0.1 * jax.random.normal(k5, (C_mid,), jnp.float32)   # bn16 gamma
    b1 = 0.1 * jax.random.normal(k6, (C_mid,), jnp.float32)         # bn16 beta
    g2 = 1.0 + 0.1 * jax.random.normal(k7, (C_in,), jnp.float32)    # bn17 gamma
    b2 = 0.1 * jax.random.normal(k8, (C_in,), jnp.float32)          # bn17 beta

    ref = _reference(x84, x72, w1, g1, b1, w2, g2, b2)

    # (a) default tiling: single full-P tile per pass.
    out_a = jax.jit(fused_forward)(x84, x72, w1, g1, b1, w2, g2, b2)
    jax.block_until_ready(out_a)
    assert out_a.shape == (N, C_in, H, W)
    err_a = float(jnp.max(jnp.abs(out_a - ref)))
    assert err_a < 5e-2, f"default tiling: max abs error too large: {err_a}"

    # (b) block_p=128: multi-tile grid, megacore core-slot split, and a partial
    #     last tile (P=192) to exercise the masked stats path.
    out_b = jax.jit(functools.partial(fused_forward, block_p=128))(
        x84, x72, w1, g1, b1, w2, g2, b2)
    jax.block_until_ready(out_b)
    err_b = float(jnp.max(jnp.abs(out_b - ref)))
    assert err_b < 5e-2, f"tiled path: max abs error too large: {err_b}"

    print("KERNEL_OK")
</pallas_src>

<mosaic_0001>
module attributes {stable_mosaic.version = 11 : i64} {
  func.func @kernel(%arg0: i32, %arg1: i32, %arg2: memref<192x192xf32, #tpu.memory_space<vmem>>, %arg3: memref<32x192xf32, #tpu.memory_space<vmem>>, %arg4: memref<32x192xf32, #tpu.memory_space<vmem>>, %arg5: memref<32x192xbf16, #tpu.memory_space<vmem>>, %arg6: memref<32x1xf32, #tpu.memory_space<vmem>>, %arg7: memref<32x1xf32, #tpu.memory_space<vmem>>, %arg8: memref<32x32xf32, #tpu.memory_space<vmem>>, %arg9: memref<32x32xf32, #tpu.memory_space<vmem>>, %arg10: memref<32x32xf32, #tpu.memory_space<vmem>>) attributes {dimension_semantics = [#tpu.dimension_semantics<parallel>, #tpu.dimension_semantics<arbitrary>], iteration_bounds = array<i64: 1, 1>, scalar_prefetch = 0 : i64, scratch_operands = 0 : i64, tpu.core_type = #tpu.core_type<tc>, window_params = [{transform_indices = @transform_0, window_bounds = array<i64: 192, 192>}, {transform_indices = @transform_1, window_bounds = array<i64: 32, 192>}, {pipeline_mode = #tpu.pipeline_mode<synchronous>, transform_indices = @transform_2, window_bounds = array<i64: 32, 192>}, {transform_indices = @transform_3, window_bounds = array<i64: 32, 192>}, {transform_indices = @transform_4, window_bounds = array<i64: 32, 1>}, {transform_indices = @transform_5, window_bounds = array<i64: 32, 1>}, {transform_indices = @transform_6, window_bounds = array<i64: 32, 32>}, {transform_indices = @transform_7, window_bounds = array<i64: 32, 32>}, {transform_indices = @transform_8, window_bounds = array<i64: 32, 32>}]} {
    %c0 = arith.constant 0 : index
    %c0_0 = arith.constant 0 : index
    %0 = vector.load %arg4[%c0, %c0_0] : memref<32x192xf32, #tpu.memory_space<vmem>>, vector<32x192xf32>
    %c0_1 = arith.constant 0 : index
    %c0_2 = arith.constant 0 : index
    %1 = vector.load %arg2[%c0_1, %c0_2] : memref<192x192xf32, #tpu.memory_space<vmem>>, vector<192x192xf32>
    %cst = arith.constant dense<0.000000e+00> : vector<32x192xf32>
    %2 = tpu.matmul %0, %1, %cst {dimension_numbers = #tpu.dot_dimension_numbers<[1], [0], [0], [1], [0, 0, 1, 1], [], []>} : vector<32x192xf32>, vector<192x192xf32>, vector<32x192xf32> -> vector<32x192xf32>
    %c0_i32 = arith.constant 0 : i32
    %3 = arith.cmpi eq, %arg1, %c0_i32 : i32
    %4 = arith.extui %3 : i1 to i32
    %c0_i32_3 = arith.constant 0 : i32
    %5 = arith.cmpi ne, %4, %c0_i32_3 : i32
    scf.if %5 {
      %cst_33 = arith.constant 0.000000e+00 : f32
      %32 = vector.broadcast %cst_33 : f32 to vector<32x1xf32>
      %c0_34 = arith.constant 0 : index
      %c0_35 = arith.constant 0 : index
      %33 = vector.load %arg6[%c0_34, %c0_35] : memref<32x1xf32, #tpu.memory_space<vmem>>, vector<32x1xf32>
      tpu.vector_store %arg6[%c0_34, %c0_35], %32 {strides = array<i32>} : memref<32x1xf32, #tpu.memory_space<vmem>>, vector<32x1xf32>,
      %cst_36 = arith.constant 0.000000e+00 : f32
      %34 = vector.broadcast %cst_36 : f32 to vector<32x1xf32>
      %c0_37 = arith.constant 0 : index
      %c0_38 = arith.constant 0 : index
      %35 = vector.load %arg7[%c0_37, %c0_38] : memref<32x1xf32, #tpu.memory_space<vmem>>, vector<32x1xf32>
      tpu.vector_store %arg7[%c0_37, %c0_38], %34 {strides = array<i32>} : memref<32x1xf32, #tpu.memory_space<vmem>>, vector<32x1xf32>,
      %cst_39 = arith.constant 0.000000e+00 : f32
      %36 = vector.broadcast %cst_39 : f32 to vector<32x32xf32>
      %c0_40 = arith.constant 0 : index
      %c0_41 = arith.constant 0 : index
      %37 = vector.load %arg8[%c0_40, %c0_41] : memref<32x32xf32, #tpu.memory_space<vmem>>, vector<32x32xf32>
      tpu.vector_store %arg8[%c0_40, %c0_41], %36 {strides = array<i32>} : memref<32x32xf32, #tpu.memory_space<vmem>>, vector<32x32xf32>,
      %cst_42 = arith.constant 0.000000e+00 : f32
      %38 = vector.broadcast %cst_42 : f32 to vector<32x32xf32>
      %c0_43 = arith.constant 0 : index
      %c0_44 = arith.constant 0 : index
      %39 = vector.load %arg9[%c0_43, %c0_44] : memref<32x32xf32, #tpu.memory_space<vmem>>, vector<32x32xf32>
      tpu.vector_store %arg9[%c0_43, %c0_44], %38 {strides = array<i32>} : memref<32x32xf32, #tpu.memory_space<vmem>>, vector<32x32xf32>,
      %cst_45 = arith.constant 0.000000e+00 : f32
      %40 = vector.broadcast %cst_45 : f32 to vector<32x32xf32>
      %c0_46 = arith.constant 0 : index
      %c0_47 = arith.constant 0 : index
      %41 = vector.load %arg10[%c0_46, %c0_47] : memref<32x32xf32, #tpu.memory_space<vmem>>, vector<32x32xf32>
      tpu.vector_store %arg10[%c0_46, %c0_47], %40 {strides = array<i32>} : memref<32x32xf32, #tpu.memory_space<vmem>>, vector<32x32xf32>,
    } else {
    }
    %6 = arith.truncf %2 : vector<32x192xf32> to vector<32x192xbf16>
    %c0_4 = arith.constant 0 : index
    %c0_5 = arith.constant 0 : index
    %7 = vector.load %arg3[%c0_4, %c0_5] : memref<32x192xf32, #tpu.memory_space<vmem>>, vector<32x192xf32>
    %c0_6 = arith.constant 0 : index
    %c0_7 = arith.constant 0 : index
    %8 = vector.load %arg5[%c0_6, %c0_7] : memref<32x192xbf16, #tpu.memory_space<vmem>>, vector<32x192xbf16>
    tpu.vector_store %arg5[%c0_6, %c0_7], %6 {strides = array<i32>} : memref<32x192xbf16, #tpu.memory_space<vmem>>, vector<32x192xbf16>,
    %9 = arith.extf %6 : vector<32x192xbf16> to vector<32x192xf32>
    %c0_8 = arith.constant 0 : index
    %c0_9 = arith.constant 0 : index
    %10 = vector.load %arg6[%c0_8, %c0_9] : memref<32x1xf32, #tpu.memory_space<vmem>>, vector<32x1xf32>
    %cst_10 = arith.constant dense<0.000000e+00> : vector<32xf32>
    %11 = vector.multi_reduction <add>, %9, %cst_10 [1] : vector<32x192xf32> to vector<32xf32>
    %12 = vector.shape_cast %11 : vector<32xf32> to vector<32x1xf32>
    %13 = arith.addf %10, %12 : vector<32x1xf32>
    %c0_11 = arith.constant 0 : index
    %c0_12 = arith.constant 0 : index
    %14 = vector.load %arg6[%c0_11, %c0_12] : memref<32x1xf32, #tpu.memory_space<vmem>>, vector<32x1xf32>
    tpu.vector_store %arg6[%c0_11, %c0_12], %13 {strides = array<i32>} : memref<32x1xf32, #tpu.memory_space<vmem>>, vector<32x1xf32>,
    %c0_13 = arith.constant 0 : index
    %c0_14 = arith.constant 0 : index
    %15 = vector.load %arg7[%c0_13, %c0_14] : memref<32x1xf32, #tpu.memory_space<vmem>>, vector<32x1xf32>
    %cst_15 = arith.constant dense<0.000000e+00> : vector<32xf32>
    %16 = vector.multi_reduction <add>, %7, %cst_15 [1] : vector<32x192xf32> to vector<32xf32>
    %17 = vector.shape_cast %16 : vector<32xf32> to vector<32x1xf32>
    %18 = arith.addf %15, %17 : vector<32x1xf32>
    %c0_16 = arith.constant 0 : index
    %c0_17 = arith.constant 0 : index
    %19 = vector.load %arg7[%c0_16, %c0_17] : memref<32x1xf32, #tpu.memory_space<vmem>>, vector<32x1xf32>
    tpu.vector_store %arg7[%c0_16, %c0_17], %18 {strides = array<i32>} : memref<32x1xf32, #tpu.memory_space<vmem>>, vector<32x1xf32>,
    %c0_18 = arith.constant 0 : index
    %c0_19 = arith.constant 0 : index
    %20 = vector.load %arg8[%c0_18, %c0_19] : memref<32x32xf32, #tpu.memory_space<vmem>>, vector<32x32xf32>
    %cst_20 = arith.constant dense<0.000000e+00> : vector<32x32xf32>
    %21 = tpu.matmul %9, %9, %cst_20 {dimension_numbers = #tpu.dot_dimension_numbers<[1], [1], [0], [0], [0, 0, 1, 0], [], []>} : vector<32x192xf32>, vector<32x192xf32>, vector<32x32xf32> -> vector<32x32xf32>
    %22 = arith.addf %20, %21 : vector<32x32xf32>
    %c0_21 = arith.constant 0 : index
    %c0_22 = arith.constant 0 : index
    %23 = vector.load %arg8[%c0_21, %c0_22] : memref<32x32xf32, #tpu.memory_space<vmem>>, vector<32x32xf32>
    tpu.vector_store %arg8[%c0_21, %c0_22], %22 {strides = array<i32>} : memref<32x32xf32, #tpu.memory_space<vmem>>, vector<32x32xf32>,
    %c0_23 = arith.constant 0 : index
    %c0_24 = arith.constant 0 : index
    %24 = vector.load %arg9[%c0_23, %c0_24] : memref<32x32xf32, #tpu.memory_space<vmem>>, vector<32x32xf32>
    %cst_25 = arith.constant dense<0.000000e+00> : vector<32x32xf32>
    %25 = tpu.matmul %9, %7, %cst_25 {dimension_numbers = #tpu.dot_dimension_numbers<[1], [1], [0], [0], [0, 0, 1, 0], [], []>} : vector<32x192xf32>, vector<32x192xf32>, vector<32x32xf32> -> vector<32x32xf32>
    %26 = arith.addf %24, %25 : vector<32x32xf32>
    %c0_26 = arith.constant 0 : index
    %c0_27 = arith.constant 0 : index
    %27 = vector.load %arg9[%c0_26, %c0_27] : memref<32x32xf32, #tpu.memory_space<vmem>>, vector<32x32xf32>
    tpu.vector_store %arg9[%c0_26, %c0_27], %26 {strides = array<i32>} : memref<32x32xf32, #tpu.memory_space<vmem>>, vector<32x32xf32>,
    %c0_28 = arith.constant 0 : index
    %c0_29 = arith.constant 0 : index
    %28 = vector.load %arg10[%c0_28, %c0_29] : memref<32x32xf32, #tpu.memory_space<vmem>>, vector<32x32xf32>
    %cst_30 = arith.constant dense<0.000000e+00> : vector<32x32xf32>
    %29 = tpu.matmul %7, %7, %cst_30 {dimension_numbers = #tpu.dot_dimension_numbers<[1], [1], [0], [0], [0, 0, 1, 0], [], []>} : vector<32x192xf32>, vector<32x192xf32>, vector<32x32xf32> -> vector<32x32xf32>
    %30 = arith.addf %28, %29 : vector<32x32xf32>
    %c0_31 = arith.constant 0 : index
    %c0_32 = arith.constant 0 : index
    %31 = vector.load %arg10[%c0_31, %c0_32] : memref<32x32xf32, #tpu.memory_space<vmem>>, vector<32x32xf32>
    tpu.vector_store %arg10[%c0_31, %c0_32], %30 {strides = array<i32>} : memref<32x32xf32, #tpu.memory_space<vmem>>, vector<32x32xf32>,
    return
  }
  func.func @transform_0(%arg0: i32, %arg1: i32) -> (i32, i32) {
    %c1_i32 = arith.constant 1 : i32
    %0 = arith.muli %arg0, %c1_i32 : i32
    %1 = arith.addi %0, %arg1 : i32
    %c0_i32 = arith.constant 0 : i32
    %c0_i32_0 = arith.constant 0 : i32
    return %c0_i32, %1 : i32, i32
  }
  func.func @transform_1(%arg0: i32, %arg1: i32) -> (i32, i32) {
    %c1_i32 = arith.constant 1 : i32
    %0 = arith.muli %arg0, %c1_i32 : i32
    %1 = arith.addi %0, %arg1 : i32
    %c0_i32 = arith.constant 0 : i32
    %c0_i32_0 = arith.constant 0 : i32
    return %c0_i32, %1 : i32, i32
  }
  func.func @transform_2(%arg0: i32, %arg1: i32) -> (i32, i32) {
    %c0_i32 = arith.constant 0 : i32
    %c0_i32_0 = arith.constant 0 : i32
    %c0_i32_1 = arith.constant 0 : i32
    return %c0_i32, %c0_i32_0 : i32, i32
  }
  func.func @transform_3(%arg0: i32, %arg1: i32) -> (i32, i32) {
    %c1_i32 = arith.constant 1 : i32
    %0 = arith.muli %arg0, %c1_i32 : i32
    %1 = arith.addi %0, %arg1 : i32
    %c0_i32 = arith.constant 0 : i32
    %c0_i32_0 = arith.constant 0 : i32
    return %c0_i32, %1 : i32, i32
  }
  func.func @transform_4(%arg0: i32, %arg1: i32) -> (i32, i32) {
    %c0_i32 = arith.constant 0 : i32
    %c0_i32_0 = arith.constant 0 : i32
    return %arg0, %c0_i32 : i32, i32
  }
  func.func @transform_5(%arg0: i32, %arg1: i32) -> (i32, i32) {
    %c0_i32 = arith.constant 0 : i32
    %c0_i32_0 = arith.constant 0 : i32
    return %arg0, %c0_i32 : i32, i32
  }
  func.func @transform_6(%arg0: i32, %arg1: i32) -> (i32, i32) {
    %c0_i32 = arith.constant 0 : i32
    %c0_i32_0 = arith.constant 0 : i32
    return %arg0, %c0_i32 : i32, i32
  }
  func.func @transform_7(%arg0: i32, %arg1: i32) -> (i32, i32) {
    %c0_i32 = arith.constant 0 : i32
    %c0_i32_0 = arith.constant 0 : i32
    return %arg0, %c0_i32 : i32, i32
  }
  func.func @transform_8(%arg0: i32, %arg1: i32) -> (i32, i32) {
    %c0_i32 = arith.constant 0 : i32
    %c0_i32_0 = arith.constant 0 : i32
    return %arg0, %c0_i32 : i32, i32
  }
}

module attributes {stable_mosaic.version = 11 : i64} {
  func.func @_pass2_kernel(%arg0: i32, %arg1: memref<32x192xbf16, #tpu.memory_space<vmem>>, %arg2: memref<32x192xf32, #tpu.memory_space<vmem>>, %arg3: memref<192x32xf32, #tpu.memory_space<vmem>>, %arg4: memref<32x1xf32, #tpu.memory_space<vmem>>, %arg5: memref<32x1xf32, #tpu.memory_space<vmem>>, %arg6: memref<192x1xf32, #tpu.memory_space<vmem>>, %arg7: memref<192x1xf32, #tpu.memory_space<vmem>>, %arg8: memref<192x192xf32, #tpu.memory_space<vmem>>) attributes {dimension_semantics = [#tpu.dimension_semantics<parallel>], iteration_bounds = array<i64: 1>, scalar_prefetch = 0 : i64, scratch_operands = 0 : i64, tpu.core_type = #tpu.core_type<tc>, window_params = [{transform_indices = @transform_0, window_bounds = array<i64: 32, 192>}, {transform_indices = @transform_1, window_bounds = array<i64: 32, 192>}, {pipeline_mode = #tpu.pipeline_mode<synchronous>, transform_indices = @transform_2, window_bounds = array<i64: 192, 32>}, {pipeline_mode = #tpu.pipeline_mode<synchronous>, transform_indices = @transform_3, window_bounds = array<i64: 32, 1>}, {pipeline_mode = #tpu.pipeline_mode<synchronous>, transform_indices = @transform_4, window_bounds = array<i64: 32, 1>}, {pipeline_mode = #tpu.pipeline_mode<synchronous>, transform_indices = @transform_5, window_bounds = array<i64: 192, 1>}, {pipeline_mode = #tpu.pipeline_mode<synchronous>, transform_indices = @transform_6, window_bounds = array<i64: 192, 1>}, {transform_indices = @transform_7, window_bounds = array<i64: 192, 192>}]} {
    %c0 = arith.constant 0 : index
    %c0_0 = arith.constant 0 : index
    %0 = vector.load %arg1[%c0, %c0_0] : memref<32x192xbf16, #tpu.memory_space<vmem>>, vector<32x192xbf16>
    %1 = arith.extf %0 : vector<32x192xbf16> to vector<32x192xf32>
    %c0_1 = arith.constant 0 : index
    %c0_2 = arith.constant 0 : index
    %2 = vector.load %arg4[%c0_1, %c0_2] : memref<32x1xf32, #tpu.memory_space<vmem>>, vector<32x1xf32>
    %3 = vector.broadcast %2 : vector<32x1xf32> to vector<32x192xf32>
    %4 = arith.mulf %1, %3 : vector<32x192xf32>
    %c0_3 = arith.constant 0 : index
    %c0_4 = arith.constant 0 : index
    %5 = vector.load %arg5[%c0_3, %c0_4] : memref<32x1xf32, #tpu.memory_space<vmem>>, vector<32x1xf32>
    %6 = vector.broadcast %5 : vector<32x1xf32> to vector<32x192xf32>
    %7 = arith.addf %4, %6 : vector<32x192xf32>
    %c0_5 = arith.constant 0 : index
    %c0_6 = arith.constant 0 : index
    %8 = vector.load %arg2[%c0_5, %c0_6] : memref<32x192xf32, #tpu.memory_space<vmem>>, vector<32x192xf32>
    %9 = arith.addf %7, %8 : vector<32x192xf32>
    %c0_7 = arith.constant 0 : index
    %c0_8 = arith.constant 0 : index
    %10 = vector.load %arg3[%c0_7, %c0_8] : memref<192x32xf32, #tpu.memory_space<vmem>>, vector<192x32xf32>
    %cst = arith.constant dense<0.000000e+00> : vector<192x192xf32>
    %11 = tpu.matmul %10, %9, %cst {dimension_numbers = #tpu.dot_dimension_numbers<[1], [0], [0], [1], [0, 0, 1, 1], [], []>} : vector<192x32xf32>, vector<32x192xf32>, vector<192x192xf32> -> vector<192x192xf32>
    %c0_9 = arith.constant 0 : index
    %c0_10 = arith.constant 0 : index
    %12 = vector.load %arg6[%c0_9, %c0_10] : memref<192x1xf32, #tpu.memory_space<vmem>>, vector<192x1xf32>
    %13 = vector.broadcast %12 : vector<192x1xf32> to vector<192x192xf32>
    %14 = arith.mulf %11, %13 : vector<192x192xf32>
    %c0_11 = arith.constant 0 : index
    %c0_12 = arith.constant 0 : index
    %15 = vector.load %arg7[%c0_11, %c0_12] : memref<192x1xf32, #tpu.memory_space<vmem>>, vector<192x1xf32>
    %16 = vector.broadcast %15 : vector<192x1xf32> to vector<192x192xf32>
    %17 = arith.addf %14, %16 : vector<192x192xf32>
    %c0_13 = arith.constant 0 : index
    %c0_14 = arith.constant 0 : index
    %18 = vector.load %arg8[%c0_13, %c0_14] : memref<192x192xf32, #tpu.memory_space<vmem>>, vector<192x192xf32>
    tpu.vector_store %arg8[%c0_13, %c0_14], %17 {strides = array<i32>} : memref<192x192xf32, #tpu.memory_space<vmem>>, vector<192x192xf32>,
    return
  }
  func.func @transform_0(%arg0: i32) -> (i32, i32) {
    %c0_i32 = arith.constant 0 : i32
    %c0_i32_0 = arith.constant 0 : i32
    return %c0_i32, %arg0 : i32, i32
  }
  func.func @transform_1(%arg0: i32) -> (i32, i32) {
    %c0_i32 = arith.constant 0 : i32
    %c0_i32_0 = arith.constant 0 : i32
    return %c0_i32, %arg0 : i32, i32
  }
  func.func @transform_2(%arg0: i32) -> (i32, i32) {
    %c0_i32 = arith.constant 0 : i32
    %c0_i32_0 = arith.constant 0 : i32
    %c0_i32_1 = arith.constant 0 : i32
    return %c0_i32, %c0_i32_0 : i32, i32
  }
  func.func @transform_3(%arg0: i32) -> (i32, i32) {
    %c0_i32 = arith.constant 0 : i32
    %c0_i32_0 = arith.constant 0 : i32
    %c0_i32_1 = arith.constant 0 : i32
    return %c0_i32, %c0_i32_0 : i32, i32
  }
  func.func @transform_4(%arg0: i32) -> (i32, i32) {
    %c0_i32 = arith.constant 0 : i32
    %c0_i32_0 = arith.constant 0 : i32
    %c0_i32_1 = arith.constant 0 : i32
    return %c0_i32, %c0_i32_0 : i32, i32
  }
  func.func @transform_5(%arg0: i32) -> (i32, i32) {
    %c0_i32 = arith.constant 0 : i32
    %c0_i32_0 = arith.constant 0 : i32
    %c0_i32_1 = arith.constant 0 : i32
    return %c0_i32, %c0_i32_0 : i32, i32
  }
  func.func @transform_6(%arg0: i32) -> (i32, i32) {
    %c0_i32 = arith.constant 0 : i32
    %c0_i32_0 = arith.constant 0 : i32
    %c0_i32_1 = arith.constant 0 : i32
    return %c0_i32, %c0_i32_0 : i32, i32
  }
  func.func @transform_7(%arg0: i32) -> (i32, i32) {
    %c0_i32 = arith.constant 0 : i32
    %c0_i32_0 = arith.constant 0 : i32
    return %c0_i32, %arg0 : i32, i32
  }
}

</mosaic_0001>

<llo_original>
// kernel: fused_forward.2
$region0: #{fused_forward.2}
  #allocation0 [shape = 'u32[]', space=smem, size = 0x4, offset = 0x4, fixed_abs, tag = 'smem constant byte address 0x4 - core index']
  #allocation1 [shape = 'u32[144,128]{1,0:T(1,128)}', space=vmem, size = 0x12000, scoped, tag = 'internal scratch']
  %s0 = inlined_call_operand.vmem [shape: f32[192,192], index: 0, kind: input, shape index: {}]
  %s1 = inlined_call_operand.vmem [shape: f32[32,192], index: 1, kind: input, shape index: {}]
  %s2 = inlined_call_operand.vmem [shape: f32[32,192], index: 2, kind: input, shape index: {}]
  %s3 = inlined_call_operand.vmem [shape: bf16[32,192], index: 3, kind: output, shape index: {0}]
  %s4 = inlined_call_operand.vmem [shape: f32[32,1], index: 4, kind: output, shape index: {1}]
  %s5 = inlined_call_operand.vmem [shape: f32[32,1], index: 5, kind: output, shape index: {2}]
  %s6 = inlined_call_operand.vmem [shape: f32[32,32], index: 6, kind: output, shape index: {3}]
  %s7 = inlined_call_operand.vmem [shape: f32[32,32], index: 7, kind: output, shape index: {4}]
  %s8 = inlined_call_operand.vmem [shape: f32[32,32], index: 8, kind: output, shape index: {5}]
  %9 = xla_tuple %s3, %s4, %s5, %s6, %s7, %s8
  %s10 = sld [smem:[#allocation0]]
  $region66: #{fused_forward.2} parent=0
    _
  %s12 = ssub.s32 1, %s10
  %s13 = scalar_select 0, %s12, %s10
  // Predicated region
  $region2: #{fused_forward.2} parent=0 // pred_check
    _
  $region3: #{fused_forward.2} parent=0 // pred_check_branch
    %15 = sbr.rel (0) target = $region5
  $region4: #{fused_forward.2} parent=0 // pred_region
    %s16 = sadd.s32 0, 0
    %s17 = smul.u32 2, %s16
    %p18 = scmp.lt.s32.totalorder %s17, 1
    %s19 = scalar_select %p18, %s17, 1
    %s20 = smul.addr %s19, 8
    %s21 = scalar_lea.vmem %s0, %s20
    %s22 = sadd.s32 0, 0
    %s23 = smul.u32 2, %s22
  $region5: #{fused_forward.2} parent=0 // pred_fallthru
    _
  // Predicated region
  $region6: #{fused_forward.2} parent=0 // pred_check
    _
  $region7: #{fused_forward.2} parent=0 // pred_check_branch
    %25 = sbr.rel (0) target = $region9
  $region8: #{fused_forward.2} parent=0 // pred_region
    %s26 = sadd.s32 0, 0
    %s27 = smul.u32 2, %s26
    %p28 = scmp.lt.s32.totalorder %s27, 1
    %s29 = scalar_select %p28, %s27, 1
    %s30 = smul.addr %s29, 8
    %s31 = scalar_lea.vmem %s1, %s30
    %s32 = sadd.s32 0, 0
    %s33 = smul.u32 2, %s32
  $region9: #{fused_forward.2} parent=0 // pred_fallthru
    _
  // Predicated region
  $region10: #{fused_forward.2} parent=0 // pred_check
    _
  $region11: #{fused_forward.2} parent=0 // pred_check_branch
    %35 = sbr.rel (0) target = $region13
  $region12: #{fused_forward.2} parent=0 // pred_region
    _
  $region13: #{fused_forward.2} parent=0 // pred_fallthru
    _
  %s36 = sadd.s32 0, 0
  %s37 = smul.u32 2, %s36
  %p38 = scmp.lt.s32.totalorder %s37, 1
  %s39 = scalar_select %p38, %s37, 1
  %s40 = smul.addr %s39, 8
  %s41 = scalar_lea.vmem %s0, %s40
  %s42 = sadd.s32 0, 0
  %s43 = smul.u32 2, %s42
  %p44 = scmp.lt.s32.totalorder %s43, 1
  %s45 = scalar_select %p44, %s43, 1
  %s46 = smul.addr %s45, 8
  %s47 = scalar_lea.vmem %s1, %s46
  %s48 = sadd.s32 0, 0
  %s49 = smul.u32 2, %s48
  %p50 = scmp.lt.s32.totalorder %s49, 1
  %s51 = scalar_select %p50, %s49, 1
  %s52 = smul.addr %s51, 4
  %s53 = scalar_lea.vmem %s3, %s52
  %s54 = sadd.s32 0, 0
  %s55 = smul.u32 2, %s54
  %p56 = scmp.lt.s32.totalorder %s55, 1
  %s57 = scalar_select %p56, %s55, 1
  %s58 = smul.addr %s57, 8
  %s59 = scalar_lea.vmem %s0, %s58
  %s60 = sadd.s32 0, 0
  %s61 = smul.u32 2, %s60
  %s62 = sadd.s32 0, 0
  %s63 = smul.u32 2, %s62
  %p64 = scmp.lt.s32.totalorder %s63, 1
  %s65 = scalar_select %p64, %s63, 1
  %s66 = smul.addr %s65, 8
  %s67 = scalar_lea.vmem %s1, %s66
  %s68 = sadd.s32 0, 0
  %s69 = smul.u32 2, %s68
  %s70 = sadd.s32 0, 0
  %s71 = smul.u32 2, %s70
  %p72 = scmp.lt.s32.totalorder %s71, 1
  %s73 = scalar_select %p72, %s71, 1
  %s74 = smul.addr %s73, 4
  %s75 = scalar_lea.vmem %s3, %s74
  %s76 = sadd.s32 0, 0
  %s77 = smul.u32 2, %s76
  %v78 = vld [vmem:[%s2] sm:$0xff]
  %v79 = vld [vmem:[%s2 + $0x8] sm:$0xff]
  %v80 = vld [vmem:[%s2 + $0x10] sm:$0xff]
  %v81 = vld [vmem:[%s2 + $0x18] sm:$0xff]
  %v82 = vld [vmem:[%s2 + $0x20] sm:$0xff]
  %v83 = vld [vmem:[%s2 + $0x28] sm:$0xff]
  %v84 = vld [vmem:[%s2 + $0x30] sm:$0xff]
  %v85 = vld [vmem:[%s2 + $0x38] sm:$0xff]
  %v86 = vld [vmem:[%s59] sm:$0xff]
  %v87 = vld [vmem:[%s59 + $0x8] sm:$0xff]
  %v88 = vld [vmem:[%s59 + $0x10] sm:$0xff]
  %v89 = vld [vmem:[%s59 + $0x18] sm:$0xff]
  %v90 = vld [vmem:[%s59 + $0x20] sm:$0xff]
  %v91 = vld [vmem:[%s59 + $0x28] sm:$0xff]
  %v92 = vld [vmem:[%s59 + $0x30] sm:$0xff]
  %v93 = vld [vmem:[%s59 + $0x38] sm:$0xff]
  %v94 = vld [vmem:[%s59 + $0x40] sm:$0xff]
  %v95 = vld [vmem:[%s59 + $0x48] sm:$0xff]
  %v96 = vld [vmem:[%s59 + $0x50] sm:$0xff]
  %v97 = vld [vmem:[%s59 + $0x58] sm:$0xff]
  %v98 = vld [vmem:[%s59 + $0x60] sm:$0xff]
  %v99 = vld [vmem:[%s59 + $0x68] sm:$0xff]
  %v100 = vld [vmem:[%s59 + $0x70] sm:$0xff]
  %v101 = vld [vmem:[%s59 + $0x78] sm:$0xff]
  %v102 = vld [vmem:[%s59 + $0x80] sm:$0xff]
  %v103 = vld [vmem:[%s59 + $0x88] sm:$0xff]
  %v104 = vld [vmem:[%s59 + $0x90] sm:$0xff]
  %v105 = vld [vmem:[%s59 + $0x98] sm:$0xff]
  %v106 = vld [vmem:[%s59 + $0xa0] sm:$0xff]
  %v107 = vld [vmem:[%s59 + $0xa8] sm:$0xff]
  %v108 = vld [vmem:[%s59 + $0xb0] sm:$0xff]
  %v109 = vld [vmem:[%s59 + $0xb8] sm:$0xff]
  %v110 = vld [vmem:[%s59 + $0xc0] sm:$0xff]
  %v111 = vld [vmem:[%s59 + $0xc8] sm:$0xff]
  %v112 = vld [vmem:[%s59 + $0xd0] sm:$0xff]
  %v113 = vld [vmem:[%s59 + $0xd8] sm:$0xff]
  %v114 = vld [vmem:[%s59 + $0xe0] sm:$0xff]
  %v115 = vld [vmem:[%s59 + $0xe8] sm:$0xff]
  %v116 = vld [vmem:[%s59 + $0xf0] sm:$0xff]
  %v117 = vld [vmem:[%s59 + $0xf8] sm:$0xff]
  %v118 = vld [vmem:[%s59 + $0x100] sm:$0xff]
  %v119 = vld [vmem:[%s59 + $0x108] sm:$0xff]
  %v120 = vld [vmem:[%s59 + $0x110] sm:$0xff]
  %v121 = vld [vmem:[%s59 + $0x118] sm:$0xff]
  %v122 = vld [vmem:[%s59 + $0x120] sm:$0xff]
  %v123 = vld [vmem:[%s59 + $0x128] sm:$0xff]
  %v124 = vld [vmem:[%s59 + $0x130] sm:$0xff]
  %v125 = vld [vmem:[%s59 + $0x138] sm:$0xff]
  %v126 = vld [vmem:[%s59 + $0x140] sm:$0xff]
  %v127 = vld [vmem:[%s59 + $0x148] sm:$0xff]
  %v128 = vld [vmem:[%s59 + $0x150] sm:$0xff]
  %v129 = vld [vmem:[%s59 + $0x158] sm:$0xff]
  %v130 = vld [vmem:[%s59 + $0x160] sm:$0xff]
  %v131 = vld [vmem:[%s59 + $0x168] sm:$0xff]
  %v132 = vld [vmem:[%s59 + $0x170] sm:$0xff]
  %v133 = vld [vmem:[%s59 + $0x178] sm:$0xff]
  %vm134 = vcmask 523264
  %v136 = vsel %vm134, %v79, 0
  %v139 = vsel %vm134, %v81, 0
  %v142 = vsel %vm134, %v83, 0
  %v145 = vsel %vm134, %v85, 0
  %147 = vmatprep.subr.mxu0 %v87
  %148 = vmatpush1.msra.mxu0 %v86
  %149 = vmatprep.subr.mxu0 %v89
  %150 = vmatpush1.msra.mxu0 %v88
  %151 = vmatprep.subr.mxu0 %v91
  %152 = vmatpush1.msra.mxu0 %v90
  %153 = vmatprep.subr.mxu0 %v93
  %154 = vmatpush1.msra.mxu0 %v92
  %155 = vmatprep.subr.mxu0 %v95
  %156 = vmatpush1.msra.mxu0 %v94
  %157 = vmatprep.subr.mxu0 %v97
  %158 = vmatpush1.msra.mxu0 %v96
  %159 = vmatprep.subr.mxu0 %v99
  %160 = vmatpush1.msra.mxu0 %v98
  %161 = vmatprep.subr.mxu0 %v101
  %162 = vmatpush1.msra.mxu0 %v100
  %163 = vmatprep.subr.mxu0 %v103
  %164 = vmatpush1.msra.mxu0 %v102
  %165 = vmatprep.subr.mxu0 %v105
  %166 = vmatpush1.msra.mxu0 %v104
  %167 = vmatprep.subr.mxu0 %v107
  %168 = vmatpush1.msra.mxu0 %v106
  %169 = vmatprep.subr.mxu0 %v109
  %170 = vmatpush1.msra.mxu0 %v108
  %171 = vmatprep.subr.mxu0 %v111
  %172 = vmatpush1.msra.mxu0 %v110
  %173 = vmatprep.subr.mxu0 %v113
  %174 = vmatpush1.msra.mxu0 %v112
  %175 = vmatprep.subr.mxu0 %v115
  %176 = vmatpush1.msra.mxu0 %v114
  %177 = vmatprep.subr.mxu0 %v117
  %178 = vmatpush1.msra.mxu0 %v116
  %179 = vmatprep.subr.mxu0 %v119
  %180 = vmatpush1.msra.mxu0 %v118
  %181 = vmatprep.subr.mxu0 %v121
  %182 = vmatpush1.msra.mxu0 %v120
  %183 = vmatprep.subr.mxu0 %v123
  %184 = vmatpush1.msra.mxu0 %v122
  %185 = vmatprep.subr.mxu0 %v125
  %186 = vmatpush1.msra.mxu0 %v124
  %187 = vmatprep.subr.mxu0 %v127
  %188 = vmatpush1.msra.mxu0 %v126
  %189 = vmatprep.subr.mxu0 %v129
  %190 = vmatpush1.msra.mxu0 %v128
  %191 = vmatprep.subr.mxu0 %v131
  %192 = vmatpush1.msra.mxu0 %v130
  %193 = vmatprep.subr.mxu0 %v133
  %194 = vmatpush1.msra.mxu0 %v132
  %195 = vmatprep.subr.mxu0 0.0
  %196 = vmatpush1.msra.mxu0 0.0
  %197 = vmatprep.subr.mxu0 0.0
  %198 = vmatpush1.msra.mxu0 0.0
  %199 = vmatprep.subr.mxu0 0.0
  %200 = vmatpush1.msra.mxu0 0.0
  %201 = vmatprep.subr.mxu0 0.0
  %202 = vmatpush1.msra.mxu0 0.0
  %203 = vmatprep.subr.mxu0 0.0
  %204 = vmatpush1.msra.mxu0 0.0
  %205 = vmatprep.subr.mxu0 0.0
  %206 = vmatpush1.msra.mxu0 0.0
  %207 = vmatprep.subr.mxu0 0.0
  %208 = vmatpush1.msra.mxu0 0.0
  %209 = vmatprep.subr.mxu0 0.0
  %210 = vmatpush1.msra.mxu0 0.0
  %211 = vmatprep.mubr.f32.mxu0 %v136
  %212 = vmatmul.mubr.f32.gmra.mrb[0].mxu0 %v78
  %v213 = vpop.f32.mrb[0].mxu0
  %v214 = vadd.f32 0.0, %v213
  %v215 = vpop.f32.mrb[0].mxu0
  %v216 = vadd.f32 0.0, %v215
  %217 = vmatprep.mubr.f32.mxu0 %v139
  %218 = vmatmul.mubr.f32.gmra.mrb[0].mxu0 %v80
  %v219 = vpop.f32.mrb[0].mxu0
  %v220 = vadd.f32 0.0, %v219
  %v221 = vpop.f32.mrb[0].mxu0
  %v222 = vadd.f32 0.0, %v221
  %223 = vmatprep.mubr.f32.mxu0 %v142
  %224 = vmatmul.mubr.f32.gmra.mrb[0].mxu0 %v82
  %v225 = vpop.f32.mrb[0].mxu0
  %v226 = vadd.f32 0.0, %v225
  %v227 = vpop.f32.mrb[0].mxu0
  %v228 = vadd.f32 0.0, %v227
  %229 = vmatprep.mubr.f32.mxu0 %v145
  %230 = vmatmul.mubr.f32.gmra.mrb[0].mxu0 %v84
  %v231 = vpop.f32.mrb[0].mxu0
  %v232 = vadd.f32 0.0, %v231
  %v233 = vpop.f32.mrb[0].mxu0
  %v234 = vadd.f32 0.0, %v233
  %235 = vdwg.mxu0
  %p236 = scmp.eq.s32.totalorder 0, 0
  // Predicated region
  $region14: #{fused_forward.2} parent=0 // pred_check
    %p237 = pneg %p236
  $region15: #{fused_forward.2} parent=0 // pred_check_branch
    %239 = sbr.rel (%p237) target = $region17
  $region16: #{fused_forward.2} parent=0 // pred_region
    %vm240 = vcmask 7168
    %241 = vst.msk [vmem:[%s4] sm:$0xff] %vm240, 0.0
    %242 = vst.msk [vmem:[%s4 + $0x8] sm:$0xff] %vm240, 0.0
    %243 = vst.msk [vmem:[%s4 + $0x10] sm:$0xff] %vm240, 0.0
    %244 = vst.msk [vmem:[%s4 + $0x18] sm:$0xff] %vm240, 0.0
    %245 = vst.msk [vmem:[%s5] sm:$0xff] %vm240, 0.0
    %246 = vst.msk [vmem:[%s5 + $0x8] sm:$0xff] %vm240, 0.0
    %247 = vst.msk [vmem:[%s5 + $0x10] sm:$0xff] %vm240, 0.0
    %248 = vst.msk [vmem:[%s5 + $0x18] sm:$0xff] %vm240, 0.0
    %vm249 = vcmask 261120
    %250 = vst.msk [vmem:[%s6] sm:$0xff] %vm249, 0.0
    %251 = vst.msk [vmem:[%s6 + $0x8] sm:$0xff] %vm249, 0.0
    %252 = vst.msk [vmem:[%s6 + $0x10] sm:$0xff] %vm249, 0.0
    %253 = vst.msk [vmem:[%s6 + $0x18] sm:$0xff] %vm249, 0.0
    %254 = vst.msk [vmem:[%s7] sm:$0xff] %vm249, 0.0
    %255 = vst.msk [vmem:[%s7 + $0x8] sm:$0xff] %vm249, 0.0
    %256 = vst.msk [vmem:[%s7 + $0x10] sm:$0xff] %vm249, 0.0
    %257 = vst.msk [vmem:[%s7 + $0x18] sm:$0xff] %vm249, 0.0
    %258 = vst.msk [vmem:[%s8] sm:$0xff] %vm249, 0.0
    %259 = vst.msk [vmem:[%s8 + $0x8] sm:$0xff] %vm249, 0.0
    %260 = vst.msk [vmem:[%s8 + $0x10] sm:$0xff] %vm249, 0.0
    %261 = vst.msk [vmem:[%s8 + $0x18] sm:$0xff] %vm249, 0.0
  $region17: #{fused_forward.2} parent=0 // pred_fallthru
    _
  %v262 = vpack.c.bf16 %v220, %v214
  %v263 = vpack.c.bf16 %v222, %v216
  %v264 = vpack.c.bf16 %v232, %v226
  %v265 = vpack.c.bf16 %v234, %v228
  %v266 = vld [vmem:[%s67] sm:$0xff]
  %v267 = vld [vmem:[%s67 + $0x8] sm:$0xff]
  %v268 = vld [vmem:[%s67 + $0x10] sm:$0xff]
  %v269 = vld [vmem:[%s67 + $0x18] sm:$0xff]
  %v270 = vld [vmem:[%s67 + $0x20] sm:$0xff]
  %v271 = vld [vmem:[%s67 + $0x28] sm:$0xff]
  %v272 = vld [vmem:[%s67 + $0x30] sm:$0xff]
  %v273 = vld [vmem:[%s67 + $0x38] sm:$0xff]
  %v278 = vunpack.c.l.b16 %v262
  %v279 = vunpack.c.l.b16 %v263
  %v280 = vunpack.c.h.b16 %v262
  %v281 = vunpack.c.h.b16 %v263
  %v282 = vunpack.c.l.b16 %v264
  %v283 = vunpack.c.l.b16 %v265
  %v284 = vunpack.c.h.b16 %v264
  %v285 = vunpack.c.h.b16 %v265
  %v286 = vpack.c.b16 %v279, %v278
  %v287 = vpack.c.b16 %v281, %v280
  %v288 = vpack.c.b16 %v283, %v282
  %v289 = vpack.c.b16 %v285, %v284
  %vm294 = vcmask 1043456
  %vm295 = vcmask 523268
  %vm296 = vmor %vm295, %vm294
  %297 = vst.msk [vmem:[%s75] sm:$0xff] %vm296, %v286
  %298 = vst.msk [vmem:[%s75 + $0x8] sm:$0xff] %vm296, %v287
  %299 = vst.msk [vmem:[%s75 + $0x10] sm:$0xff] %vm296, %v288
  %300 = vst.msk [vmem:[%s75 + $0x18] sm:$0xff] %vm296, %v289
  %v301 = vunpack.c.l.bf16 %v262
  %v302 = vunpack.c.l.bf16 %v263
  %v303 = vunpack.c.h.bf16 %v262
  %v304 = vunpack.c.h.bf16 %v263
  %v305 = vunpack.c.l.bf16 %v264
  %v306 = vunpack.c.l.bf16 %v265
  %v307 = vunpack.c.h.bf16 %v264
  %v308 = vunpack.c.h.bf16 %v265
  %v309 = vld [vmem:[%s4] sm:$0xff]
  %v310 = vld [vmem:[%s4 + $0x8] sm:$0xff]
  %v311 = vld [vmem:[%s4 + $0x10] sm:$0xff]
  %v312 = vld [vmem:[%s4 + $0x18] sm:$0xff]
  %v313 = vsel %vm134, %v302, 0.0
  %v314 = vadd.f32 %v301, %v313
  %315 = vadd.xlane.f32.xlu0 %v314
  %v316 = vpop.xlane.xlu0 %315
  %v317 = vsel %vm134, %v304, 0.0
  %v318 = vadd.f32 %v303, %v317
  %319 = vadd.xlane.f32.xlu0 %v318
  %v320 = vpop.xlane.xlu0 %319
  %v321 = vsel %vm134, %v306, 0.0
  %v322 = vadd.f32 %v305, %v321
  %323 = vadd.xlane.f32.xlu0 %v322
  %v324 = vpop.xlane.xlu0 %323
  %v325 = vsel %vm134, %v308, 0.0
  %v326 = vadd.f32 %v307, %v325
  %327 = vadd.xlane.f32.xlu0 %v326
  %v328 = vpop.xlane.xlu0 %327
  %v329 = vadd.f32 %v309, %v316
  %v330 = vadd.f32 %v310, %v320
  %v331 = vadd.f32 %v311, %v324
  %v332 = vadd.f32 %v312, %v328
  %vm333 = vcmask 7168
  %334 = vst.msk [vmem:[%s4] sm:$0xff] %vm333, %v329
  %335 = vst.msk [vmem:[%s4 + $0x8] sm:$0xff] %vm333, %v330
  %336 = vst.msk [vmem:[%s4 + $0x10] sm:$0xff] %vm333, %v331
  %337 = vst.msk [vmem:[%s4 + $0x18] sm:$0xff] %vm333, %v332
  %v338 = vld [vmem:[%s5] sm:$0xff]
  %v339 = vld [vmem:[%s5 + $0x8] sm:$0xff]
  %v340 = vld [vmem:[%s5 + $0x10] sm:$0xff]
  %v341 = vld [vmem:[%s5 + $0x18] sm:$0xff]
  %v342 = vsel %vm134, %v267, 0.0
  %v343 = vadd.f32 %v266, %v342
  %344 = vadd.xlane.f32.xlu0 %v343
  %v345 = vpop.xlane.xlu0 %344
  %v346 = vsel %vm134, %v269, 0.0
  %v347 = vadd.f32 %v268, %v346
  %348 = vadd.xlane.f32.xlu0 %v347
  %v349 = vpop.xlane.xlu0 %348
  %v350 = vsel %vm134, %v271, 0.0
  %v351 = vadd.f32 %v270, %v350
  %352 = vadd.xlane.f32.xlu0 %v351
  %v353 = vpop.xlane.xlu0 %352
  %v354 = vsel %vm134, %v273, 0.0
  %v355 = vadd.f32 %v272, %v354
  %356 = vadd.xlane.f32.xlu0 %v355
  %v357 = vpop.xlane.xlu0 %356
  %v358 = vadd.f32 %v338, %v345
  %v359 = vadd.f32 %v339, %v349
  %v360 = vadd.f32 %v340, %v353
  %v361 = vadd.f32 %v341, %v357
  %362 = vst.msk [vmem:[%s5] sm:$0xff] %vm333, %v358
  %363 = vst.msk [vmem:[%s5 + $0x8] sm:$0xff] %vm333, %v359
  %364 = vst.msk [vmem:[%s5 + $0x10] sm:$0xff] %vm333, %v360
  %365 = vst.msk [vmem:[%s5 + $0x18] sm:$0xff] %vm333, %v361
  %v366 = vld [vmem:[%s6] sm:$0xff]
  %v367 = vld [vmem:[%s6 + $0x8] sm:$0xff]
  %v368 = vld [vmem:[%s6 + $0x10] sm:$0xff]
  %v369 = vld [vmem:[%s6 + $0x18] sm:$0xff]
  %v371 = vsel %vm134, %v302, 0
  %v374 = vsel %vm134, %v304, 0
  %v377 = vsel %vm134, %v306, 0
  %v380 = vsel %vm134, %v308, 0
  %382 = vmatprep.subr.mxu0 %v371
  %383 = vmatpush1.xpose.msra.mxu0 %v301
  %384 = vmatprep.subr.mxu0 %v374
  %385 = vmatpush1.xpose.msra.mxu0 %v303
  %386 = vmatprep.subr.mxu0 %v377
  %387 = vmatpush1.xpose.msra.mxu0 %v305
  %388 = vmatprep.subr.mxu0 %v380
  %389 = vmatpush1.xpose.msra.mxu0 %v307
  %390 = vmatprep.subr.mxu0 0.0
  %391 = vmatpush1.xpose.msra.mxu0 0.0
  %392 = vmatprep.subr.mxu0 0.0
  %393 = vmatpush1.xpose.msra.mxu0 0.0
  %394 = vmatprep.subr.mxu0 0.0
  %395 = vmatpush1.xpose.msra.mxu0 0.0
  %396 = vmatprep.subr.mxu0 0.0
  %397 = vmatpush1.xpose.msra.mxu0 0.0
  %398 = vmatprep.subr.mxu0 0.0
  %399 = vmatpush1.xpose.msra.mxu0 0.0
  %400 = vmatprep.subr.mxu0 0.0
  %401 = vmatpush1.xpose.msra.mxu0 0.0
  %402 = vmatprep.subr.mxu0 0.0
  %403 = vmatpush1.xpose.msra.mxu0 0.0
  %404 = vmatprep.subr.mxu0 0.0
  %405 = vmatpush1.xpose.msra.mxu0 0.0
  %406 = vmatprep.subr.mxu0 0.0
  %407 = vmatpush1.xpose.msra.mxu0 0.0
  %408 = vmatprep.subr.mxu0 0.0
  %409 = vmatpush1.xpose.msra.mxu0 0.0
  %410 = vmatprep.subr.mxu0 0.0
  %411 = vmatpush1.xpose.msra.mxu0 0.0
  %412 = vmatprep.subr.mxu0 0.0
  %413 = vmatpush1.xpose.msra.mxu0 0.0
  %414 = vmatprep.subr.mxu0 0.0
  %415 = vmatpush1.xpose.msra.mxu0 0.0
  %416 = vmatprep.subr.mxu0 0.0
  %417 = vmatpush1.xpose.msra.mxu0 0.0
  %418 = vmatprep.subr.mxu0 0.0
  %419 = vmatpush1.xpose.msra.mxu0 0.0
  %420 = vmatprep.subr.mxu0 0.0
  %421 = vmatpush1.xpose.msra.mxu0 0.0
  %422 = vmatprep.subr.mxu0 0.0
  %423 = vmatpush1.xpose.msra.mxu0 0.0
  %424 = vmatprep.subr.mxu0 0.0
  %425 = vmatpush1.xpose.msra.mxu0 0.0
  %426 = vmatprep.subr.mxu0 0.0
  %427 = vmatpush1.xpose.msra.mxu0 0.0
  %428 = vmatprep.subr.mxu0 0.0
  %429 = vmatpush1.xpose.msra.mxu0 0.0
  %430 = vmatprep.subr.mxu0 0.0
  %431 = vmatpush1.xpose.msra.mxu0 0.0
  %432 = vmatprep.subr.mxu0 0.0
  %433 = vmatpush1.xpose.msra.mxu0 0.0
  %434 = vmatprep.subr.mxu0 0.0
  %435 = vmatpush1.xpose.msra.mxu0 0.0
  %436 = vmatprep.subr.mxu0 0.0
  %437 = vmatpush1.xpose.msra.mxu0 0.0
  %438 = vmatprep.subr.mxu0 0.0
  %439 = vmatpush1.xpose.msra.mxu0 0.0
  %440 = vmatprep.subr.mxu0 0.0
  %441 = vmatpush1.xpose.msra.mxu0 0.0
  %442 = vmatprep.subr.mxu0 0.0
  %443 = vmatpush1.xpose.msra.mxu0 0.0
  %444 = vmatprep.subr.mxu0 0.0
  %445 = vmatpush1.xpose.msra.mxu0 0.0
  %446 = vmatprep.mubr.f32.mxu0 %v371
  %447 = vmatmul.mubr.f32.gmra.mrb[0].mxu0 %v301
  %v448 = vpop.f32.mrb[0].mxu0
  %v449 = vadd.f32 0.0, %v448
  %v450 = vpop.f32.mrb[0].mxu0
  %451 = vmatprep.mubr.f32.mxu0 %v374
  %452 = vmatmul.mubr.f32.gmra.mrb[0].mxu0 %v303
  %v453 = vpop.f32.mrb[0].mxu0
  %v454 = vadd.f32 0.0, %v453
  %v455 = vpop.f32.mrb[0].mxu0
  %456 = vmatprep.mubr.f32.mxu0 %v377
  %457 = vmatmul.mubr.f32.gmra.mrb[0].mxu0 %v305
  %v458 = vpop.f32.mrb[0].mxu0
  %v459 = vadd.f32 0.0, %v458
  %v460 = vpop.f32.mrb[0].mxu0
  %461 = vmatprep.mubr.f32.mxu0 %v380
  %462 = vmatmul.mubr.f32.gmra.mrb[0].mxu0 %v307
  %v463 = vpop.f32.mrb[0].mxu0
  %v464 = vadd.f32 0.0, %v463
  %v465 = vpop.f32.mrb[0].mxu0
  %466 = vdwg.mxu0
  %v467 = vadd.f32 %v366, %v449
  %v468 = vadd.f32 %v367, %v454
  %v469 = vadd.f32 %v368, %v459
  %v470 = vadd.f32 %v369, %v464
  %vm471 = vcmask 261120
  %472 = vst.msk [vmem:[%s6] sm:$0xff] %vm471, %v467
  %473 = vst.msk [vmem:[%s6 + $0x8] sm:$0xff] %vm471, %v468
  %474 = vst.msk [vmem:[%s6 + $0x10] sm:$0xff] %vm471, %v469
  %475 = vst.msk [vmem:[%s6 + $0x18] sm:$0xff] %vm471, %v470
  %v476 = vld [vmem:[%s7] sm:$0xff]
  %v477 = vld [vmem:[%s7 + $0x8] sm:$0xff]
  %v478 = vld [vmem:[%s7 + $0x10] sm:$0xff]
  %v479 = vld [vmem:[%s7 + $0x18] sm:$0xff]
  %v481 = vsel %vm134, %v267, 0
  %v484 = vsel %vm134, %v269, 0
  %v487 = vsel %vm134, %v271, 0
  %v490 = vsel %vm134, %v273, 0
  %492 = vmatprep.subr.mxu0 %v481
  %493 = vmatpush1.xpose.msra.mxu0 %v266
  %494 = vmatprep.subr.mxu0 %v484
  %495 = vmatpush1.xpose.msra.mxu0 %v268
  %496 = vmatprep.subr.mxu0 %v487
  %497 = vmatpush1.xpose.msra.mxu0 %v270
  %498 = vmatprep.subr.mxu0 %v490
  %499 = vmatpush1.xpose.msra.mxu0 %v272
  %500 = vmatprep.subr.mxu0 0.0
  %501 = vmatpush1.xpose.msra.mxu0 0.0
  %502 = vmatprep.subr.mxu0 0.0
  %503 = vmatpush1.xpose.msra.mxu0 0.0
  %504 = vmatprep.subr.mxu0 0.0
  %505 = vmatpush1.xpose.msra.mxu0 0.0
  %506 = vmatprep.subr.mxu0 0.0
  %507 = vmatpush1.xpose.msra.mxu0 0.0
  %508 = vmatprep.subr.mxu0 0.0
  %509 = vmatpush1.xpose.msra.mxu0 0.0
  %510 = vmatprep.subr.mxu0 0.0
  %511 = vmatpush1.xpose.msra.mxu0 0.0
  %512 = vmatprep.subr.mxu0 0.0
  %513 = vmatpush1.xpose.msra.mxu0 0.0
  %514 = vmatprep.subr.mxu0 0.0
  %515 = vmatpush1.xpose.msra.mxu0 0.0
  %516 = vmatprep.subr.mxu0 0.0
  %517 = vmatpush1.xpose.msra.mxu0 0.0
  %518 = vmatprep.subr.mxu0 0.0
  %519 = vmatpush1.xpose.msra.mxu0 0.0
  %520 = vmatprep.subr.mxu0 0.0
  %521 = vmatpush1.xpose.msra.mxu0 0.0
  %522 = vmatprep.subr.mxu0 0.0
  %523 = vmatpush1.xpose.msra.mxu0 0.0
  %524 = vmatprep.subr.mxu0 0.0
  %525 = vmatpush1.xpose.msra.mxu0 0.0
  %526 = vmatprep.subr.mxu0 0.0
  %527 = vmatpush1.xpose.msra.mxu0 0.0
  %528 = vmatprep.subr.mxu0 0.0
  %529 = vmatpush1.xpose.msra.mxu0 0.0
  %530 = vmatprep.subr.mxu0 0.0
  %531 = vmatpush1.xpose.msra.mxu0 0.0
  %532 = vmatprep.subr.mxu0 0.0
  %533 = vmatpush1.xpose.msra.mxu0 0.0
  %534 = vmatprep.subr.mxu0 0.0
  %535 = vmatpush1.xpose.msra.mxu0 0.0
  %536 = vmatprep.subr.mxu0 0.0
  %537 = vmatpush1.xpose.msra.mxu0 0.0
  %538 = vmatprep.subr.mxu0 0.0
  %539 = vmatpush1.xpose.msra.mxu0 0.0
  %540 = vmatprep.subr.mxu0 0.0
  %541 = vmatpush1.xpose.msra.mxu0 0.0
  %542 = vmatprep.subr.mxu0 0.0
  %543 = vmatpush1.xpose.msra.mxu0 0.0
  %544 = vmatprep.subr.mxu0 0.0
  %545 = vmatpush1.xpose.msra.mxu0 0.0
  %546 = vmatprep.subr.mxu0 0.0
  %547 = vmatpush1.xpose.msra.mxu0 0.0
  %548 = vmatprep.subr.mxu0 0.0
  %549 = vmatpush1.xpose.msra.mxu0 0.0
  %550 = vmatprep.subr.mxu0 0.0
  %551 = vmatpush1.xpose.msra.mxu0 0.0
  %552 = vmatprep.subr.mxu0 0.0
  %553 = vmatpush1.xpose.msra.mxu0 0.0
  %554 = vmatprep.subr.mxu0 0.0
  %555 = vmatpush1.xpose.msra.mxu0 0.0
  %556 = vmatprep.mubr.f32.mxu0 %v371
  %557 = vmatmul.mubr.f32.gmra.mrb[0].mxu0 %v301
  %v558 = vpop.f32.mrb[0].mxu0
  %v559 = vadd.f32 0.0, %v558
  %v560 = vpop.f32.mrb[0].mxu0
  %561 = vmatprep.mubr.f32.mxu0 %v374
  %562 = vmatmul.mubr.f32.gmra.mrb[0].mxu0 %v303
  %v563 = vpop.f32.mrb[0].mxu0
  %v564 = vadd.f32 0.0, %v563
  %v565 = vpop.f32.mrb[0].mxu0
  %566 = vmatprep.mubr.f32.mxu0 %v377
  %567 = vmatmul.mubr.f32.gmra.mrb[0].mxu0 %v305
  %v568 = vpop.f32.mrb[0].mxu0
  %v569 = vadd.f32 0.0, %v568
  %v570 = vpop.f32.mrb[0].mxu0
  %571 = vmatprep.mubr.f32.mxu0 %v380
  %572 = vmatmul.mubr.f32.gmra.mrb[0].mxu0 %v307
  %v573 = vpop.f32.mrb[0].mxu0
  %v574 = vadd.f32 0.0, %v573
  %v575 = vpop.f32.mrb[0].mxu0
  %576 = vdwg.mxu0
  %v577 = vadd.f32 %v476, %v559
  %v578 = vadd.f32 %v477, %v564
  %v579 = vadd.f32 %v478, %v569
  %v580 = vadd.f32 %v479, %v574
  %581 = vst.msk [vmem:[%s7] sm:$0xff] %vm471, %v577
  %582 = vst.msk [vmem:[%s7 + $0x8] sm:$0xff] %vm471, %v578
  %583 = vst.msk [vmem:[%s7 + $0x10] sm:$0xff] %vm471, %v579
  %584 = vst.msk [vmem:[%s7 + $0x18] sm:$0xff] %vm471, %v580
  %v585 = vld [vmem:[%s8] sm:$0xff]
  %v586 = vld [vmem:[%s8 + $0x8] sm:$0xff]
  %v587 = vld [vmem:[%s8 + $0x10] sm:$0xff]
  %v588 = vld [vmem:[%s8 + $0x18] sm:$0xff]
  %589 = vmatprep.subr.mxu0 %v481
  %590 = vmatpush1.xpose.msra.mxu0 %v266
  %591 = vmatprep.subr.mxu0 %v484
  %592 = vmatpush1.xpose.msra.mxu0 %v268
  %593 = vmatprep.subr.mxu0 %v487
  %594 = vmatpush1.xpose.msra.mxu0 %v270
  %595 = vmatprep.subr.mxu0 %v490
  %596 = vmatpush1.xpose.msra.mxu0 %v272
  %597 = vmatprep.subr.mxu0 0.0
  %598 = vmatpush1.xpose.msra.mxu0 0.0
  %599 = vmatprep.subr.mxu0 0.0
  %600 = vmatpush1.xpose.msra.mxu0 0.0
  %601 = vmatprep.subr.mxu0 0.0
  %602 = vmatpush1.xpose.msra.mxu0 0.0
  %603 = vmatprep.subr.mxu0 0.0
  %604 = vmatpush1.xpose.msra.mxu0 0.0
  %605 = vmatprep.subr.mxu0 0.0
  %606 = vmatpush1.xpose.msra.mxu0 0.0
  %607 = vmatprep.subr.mxu0 0.0
  %608 = vmatpush1.xpose.msra.mxu0 0.0
  %609 = vmatprep.subr.mxu0 0.0
  %610 = vmatpush1.xpose.msra.mxu0 0.0
  %611 = vmatprep.subr.mxu0 0.0
  %612 = vmatpush1.xpose.msra.mxu0 0.0
  %613 = vmatprep.subr.mxu0 0.0
  %614 = vmatpush1.xpose.msra.mxu0 0.0
  %615 = vmatprep.subr.mxu0 0.0
  %616 = vmatpush1.xpose.msra.mxu0 0.0
  %617 = vmatprep.subr.mxu0 0.0
  %618 = vmatpush1.xpose.msra.mxu0 0.0
  %619 = vmatprep.subr.mxu0 0.0
  %620 = vmatpush1.xpose.msra.mxu0 0.0
  %621 = vmatprep.subr.mxu0 0.0
  %622 = vmatpush1.xpose.msra.mxu0 0.0
  %623 = vmatprep.subr.mxu0 0.0
  %624 = vmatpush1.xpose.msra.mxu0 0.0
  %625 = vmatprep.subr.mxu0 0.0
  %626 = vmatpush1.xpose.msra.mxu0 0.0
  %627 = vmatprep.subr.mxu0 0.0
  %628 = vmatpush1.xpose.msra.mxu0 0.0
  %629 = vmatprep.subr.mxu0 0.0
  %630 = vmatpush1.xpose.msra.mxu0 0.0
  %631 = vmatprep.subr.mxu0 0.0
  %632 = vmatpush1.xpose.msra.mxu0 0.0
  %633 = vmatprep.subr.mxu0 0.0
  %634 = vmatpush1.xpose.msra.mxu0 0.0
  %635 = vmatprep.subr.mxu0 0.0
  %636 = vmatpush1.xpose.msra.mxu0 0.0
  %637 = vmatprep.subr.mxu0 0.0
  %638 = vmatpush1.xpose.msra.mxu0 0.0
  %639 = vmatprep.subr.mxu0 0.0
  %640 = vmatpush1.xpose.msra.mxu0 0.0
  %641 = vmatprep.subr.mxu0 0.0
  %642 = vmatpush1.xpose.msra.mxu0 0.0
  %643 = vmatprep.subr.mxu0 0.0
  %644 = vmatpush1.xpose.msra.mxu0 0.0
  %645 = vmatprep.subr.mxu0 0.0
  %646 = vmatpush1.xpose.msra.mxu0 0.0
  %647 = vmatprep.subr.mxu0 0.0
  %648 = vmatpush1.xpose.msra.mxu0 0.0
  %649 = vmatprep.subr.mxu0 0.0
  %650 = vmatpush1.xpose.msra.mxu0 0.0
  %651 = vmatprep.subr.mxu0 0.0
  %652 = vmatpush1.xpose.msra.mxu0 0.0
  %653 = vmatprep.mubr.f32.mxu0 %v481
  %654 = vmatmul.mubr.f32.gmra.mrb[0].mxu0 %v266
  %v655 = vpop.f32.mrb[0].mxu0
  %v656 = vadd.f32 0.0, %v655
  %v657 = vpop.f32.mrb[0].mxu0
  %658 = vmatprep.mubr.f32.mxu0 %v484
  %659 = vmatmul.mubr.f32.gmra.mrb[0].mxu0 %v268
  %v660 = vpop.f32.mrb[0].mxu0
  %v661 = vadd.f32 0.0, %v660
  %v662 = vpop.f32.mrb[0].mxu0
  %663 = vmatprep.mubr.f32.mxu0 %v487
  %664 = vmatmul.mubr.f32.gmra.mrb[0].mxu0 %v270
  %v665 = vpop.f32.mrb[0].mxu0
  %v666 = vadd.f32 0.0, %v665
  %v667 = vpop.f32.mrb[0].mxu0
  %668 = vmatprep.mubr.f32.mxu0 %v490
  %669 = vmatmul.mubr.f32.gmra.mrb[0].mxu0 %v272
  %v670 = vpop.f32.mrb[0].mxu0
  %v671 = vadd.f32 0.0, %v670
  %v672 = vpop.f32.mrb[0].mxu0
  %673 = vdwg.mxu0
  %v674 = vadd.f32 %v585, %v656
  %v675 = vadd.f32 %v586, %v661
  %v676 = vadd.f32 %v587, %v666
  %v677 = vadd.f32 %v588, %v671
  %678 = vst.msk [vmem:[%s8] sm:$0xff] %vm471, %v674
  %679 = vst.msk [vmem:[%s8 + $0x8] sm:$0xff] %vm471, %v675
  %680 = vst.msk [vmem:[%s8 + $0x10] sm:$0xff] %vm471, %v676
  %681 = vst.msk [vmem:[%s8 + $0x18] sm:$0xff] %vm471, %v677
  %s682 = sadd.s32 0, 0
  %s683 = smul.u32 2, %s682
  %p684 = scmp.lt.s32.totalorder %s683, 1
  %s685 = scalar_select %p684, %s683, 1
  %s686 = smul.addr %s685, 4
  %s687 = scalar_lea.vmem %s3, %s686
  // Predicated region
  $region18: #{fused_forward.2} parent=0 // pred_check
    _
  $region19: #{fused_forward.2} parent=0 // pred_check_branch
    %689 = sbr.rel (0) target = $region21
  $region20: #{fused_forward.2} parent=0 // pred_region
    %s690 = sadd.s32 0, 0
    %s691 = smul.u32 2, %s690
  $region21: #{fused_forward.2} parent=0 // pred_fallthru
    _
  // Predicated region
  $region22: #{fused_forward.2} parent=0 // pred_check
    _
  $region23: #{fused_forward.2} parent=0 // pred_check_branch
    %693 = sbr.rel (0) target = $region25
  $region24: #{fused_forward.2} parent=0 // pred_region
    _
  $region25: #{fused_forward.2} parent=0 // pred_fallthru
    _
  // Predicated region
  $region26: #{fused_forward.2} parent=0 // pred_check
    _
  $region27: #{fused_forward.2} parent=0 // pred_check_branch
    %695 = sbr.rel (0) target = $region29
  $region28: #{fused_forward.2} parent=0 // pred_region
    _
  $region29: #{fused_forward.2} parent=0 // pred_fallthru
    _
  // Predicated region
  $region30: #{fused_forward.2} parent=0 // pred_check
    _
  $region31: #{fused_forward.2} parent=0 // pred_check_branch
    %697 = sbr.rel (0) target = $region33
  $region32: #{fused_forward.2} parent=0 // pred_region
    _
  $region33: #{fused_forward.2} parent=0 // pred_fallthru
    _
  // Predicated region
  $region34: #{fused_forward.2} parent=0 // pred_check
    _
  $region35: #{fused_forward.2} parent=0 // pred_check_branch
    %699 = sbr.rel (0) target = $region37
  $region36: #{fused_forward.2} parent=0 // pred_region
    _
  $region37: #{fused_forward.2} parent=0 // pred_fallthru
    _
  // Predicated region
  $region38: #{fused_forward.2} parent=0 // pred_check
    _
  $region39: #{fused_forward.2} parent=0 // pred_check_branch
    %701 = sbr.rel (0) target = $region41
  $region40: #{fused_forward.2} parent=0 // pred_region
    _
  $region41: #{fused_forward.2} parent=0 // pred_fallthru
    _
  // Predicated region
  $region42: #{fused_forward.2} parent=0 // pred_check
    _
  $region43: #{fused_forward.2} parent=0 // pred_check_branch
    %703 = sbr.rel (0) target = $region45
  $region44: #{fused_forward.2} parent=0 // pred_region
    %s704 = sadd.s32 0, 0
    %s705 = smul.u32 2, %s704
    %p706 = scmp.lt.s32.totalorder %s705, 1
    %s707 = scalar_select %p706, %s705, 1
    %s708 = smul.addr %s707, 4
    %s709 = scalar_lea.vmem %s3, %s708
  $region45: #{fused_forward.2} parent=0 // pred_fallthru
    _
  // Predicated region
  $region46: #{fused_forward.2} parent=0 // pred_check
    _
  $region47: #{fused_forward.2} parent=0 // pred_check_branch
    %711 = sbr.rel (0) target = $region49
  $region48: #{fused_forward.2} parent=0 // pred_region
    _
  $region49: #{fused_forward.2} parent=0 // pred_fallthru
    _
  // Predicated region
  $region50: #{fused_forward.2} parent=0 // pred_check
    _
  $region51: #{fused_forward.2} parent=0 // pred_check_branch
    %713 = sbr.rel (0) target = $region53
  $region52: #{fused_forward.2} parent=0 // pred_region
    _
  $region53: #{fused_forward.2} parent=0 // pred_fallthru
    _
  // Predicated region
  $region54: #{fused_forward.2} parent=0 // pred_check
    _
  $region55: #{fused_forward.2} parent=0 // pred_check_branch
    %715 = sbr.rel (0) target = $region57
  $region56: #{fused_forward.2} parent=0 // pred_region
    _
  $region57: #{fused_forward.2} parent=0 // pred_fallthru
    _
  // Predicated region
  $region58: #{fused_forward.2} parent=0 // pred_check
    _
  $region59: #{fused_forward.2} parent=0 // pred_check_branch
    %717 = sbr.rel (0) target = $region61
  $region60: #{fused_forward.2} parent=0 // pred_region
    _
  $region61: #{fused_forward.2} parent=0 // pred_fallthru
    _
  // Predicated region
  $region62: #{fused_forward.2} parent=0 // pred_check
    _
  $region63: #{fused_forward.2} parent=0 // pred_check_branch
    %719 = sbr.rel (0) target = $region65
  $region64: #{fused_forward.2} parent=0 // pred_region
    _
  $region65: #{fused_forward.2} parent=0 // pred_fallthru
    _

// kernel: fused_forward.3
$region0: #{fused_forward.3}
  #allocation0 [shape = 'u32[]', space=smem, size = 0x4, offset = 0x4, fixed_abs, tag = 'smem constant byte address 0x4 - core index']
  #allocation1 [shape = 'u32[144,128]{1,0:T(1,128)}', space=vmem, size = 0x12000, scoped, tag = 'internal scratch']
  %s0 = inlined_call_operand.vmem [shape: bf16[32,192], index: 0, kind: input, shape index: {}]
  %s1 = inlined_call_operand.vmem [shape: f32[32,192], index: 1, kind: input, shape index: {}]
  %s2 = inlined_call_operand.vmem [shape: f32[192,32], index: 2, kind: input, shape index: {}]
  %s3 = inlined_call_operand.vmem [shape: f32[32,1], index: 3, kind: input, shape index: {}]
  %s4 = inlined_call_operand.vmem [shape: f32[32,1], index: 4, kind: input, shape index: {}]
  %s5 = inlined_call_operand.vmem [shape: f32[192,1], index: 5, kind: input, shape index: {}]
  %s6 = inlined_call_operand.vmem [shape: f32[192,1], index: 6, kind: input, shape index: {}]
  %s7 = inlined_call_operand.vmem [shape: f32[192,192], index: 7, kind: output, shape index: {}]
  %s8 = sld [smem:[#allocation0]]
  $region38: #{fused_forward.3} parent=0
    _
  %s10 = ssub.s32 1, %s8
  %s11 = scalar_select 0, %s10, %s8
  // Predicated region
  $region2: #{fused_forward.3} parent=0 // pred_check
    _
  $region3: #{fused_forward.3} parent=0 // pred_check_branch
    %13 = sbr.rel (0) target = $region5
  $region4: #{fused_forward.3} parent=0 // pred_region
    _
  $region5: #{fused_forward.3} parent=0 // pred_fallthru
    _
  // Predicated region
  $region6: #{fused_forward.3} parent=0 // pred_check
    _
  $region7: #{fused_forward.3} parent=0 // pred_check_branch
    %15 = sbr.rel (0) target = $region9
  $region8: #{fused_forward.3} parent=0 // pred_region
    _
  $region9: #{fused_forward.3} parent=0 // pred_fallthru
    _
  // Predicated region
  $region10: #{fused_forward.3} parent=0 // pred_check
    _
  $region11: #{fused_forward.3} parent=0 // pred_check_branch
    %17 = sbr.rel (0) target = $region13
  $region12: #{fused_forward.3} parent=0 // pred_region
    _
  $region13: #{fused_forward.3} parent=0 // pred_fallthru
    _
  // Predicated region
  $region14: #{fused_forward.3} parent=0 // pred_check
    _
  $region15: #{fused_forward.3} parent=0 // pred_check_branch
    %19 = sbr.rel (0) target = $region17
  $region16: #{fused_forward.3} parent=0 // pred_region
    _
  $region17: #{fused_forward.3} parent=0 // pred_fallthru
    _
  // Predicated region
  $region18: #{fused_forward.3} parent=0 // pred_check
    _
  $region19: #{fused_forward.3} parent=0 // pred_check_branch
    %21 = sbr.rel (0) target = $region21
  $region20: #{fused_forward.3} parent=0 // pred_region
    _
  $region21: #{fused_forward.3} parent=0 // pred_fallthru
    _
  // Predicated region
  $region22: #{fused_forward.3} parent=0 // pred_check
    _
  $region23: #{fused_forward.3} parent=0 // pred_check_branch
    %23 = sbr.rel (0) target = $region25
  $region24: #{fused_forward.3} parent=0 // pred_region
    _
  $region25: #{fused_forward.3} parent=0 // pred_fallthru
    _
  // Predicated region
  $region26: #{fused_forward.3} parent=0 // pred_check
    _
  $region27: #{fused_forward.3} parent=0 // pred_check_branch
    %25 = sbr.rel (0) target = $region29
  $region28: #{fused_forward.3} parent=0 // pred_region
    _
  $region29: #{fused_forward.3} parent=0 // pred_fallthru
    _
  %v26 = vld [vmem:[%s0] sm:$0xff]
  %v27 = vld [vmem:[%s0 + $0x8] sm:$0xff]
  %v28 = vld [vmem:[%s0 + $0x10] sm:$0xff]
  %v29 = vld [vmem:[%s0 + $0x18] sm:$0xff]
  %v30 = vunpack.c.l.bf16 %v26
  %v31 = vunpack.c.h.bf16 %v26
  %v32 = vunpack.c.l.bf16 %v27
  %v33 = vunpack.c.h.bf16 %v27
  %v34 = vunpack.c.l.bf16 %v28
  %v35 = vunpack.c.h.bf16 %v28
  %v36 = vunpack.c.l.bf16 %v29
  %v37 = vunpack.c.h.bf16 %v29
  %v38 = vld [vmem:[%s3] sm:$0xff]
  %v39 = vld [vmem:[%s3 + $0x8] sm:$0xff]
  %v40 = vld [vmem:[%s3 + $0x10] sm:$0xff]
  %v41 = vld [vmem:[%s3 + $0x18] sm:$0xff]
  %43 = vset.pattern.permute.xlu0 0
  %44 = vperm.xlu0 %43, %v38
  %v45 = vpop.permute.xlu0 %44
  %48 = vset.pattern.permute.xlu0 0
  %49 = vperm.xlu0 %48, %v39
  %v50 = vpop.permute.xlu0 %49
  %53 = vset.pattern.permute.xlu0 0
  %54 = vperm.xlu0 %53, %v40
  %v55 = vpop.permute.xlu0 %54
  %58 = vset.pattern.permute.xlu0 0
  %59 = vperm.xlu0 %58, %v41
  %v60 = vpop.permute.xlu0 %59
  %v62 = vmul.f32 %v30, %v45
  %v63 = vmul.f32 %v31, %v45
  %v64 = vmul.f32 %v32, %v50
  %v65 = vmul.f32 %v33, %v50
  %v66 = vmul.f32 %v34, %v55
  %v67 = vmul.f32 %v35, %v55
  %v68 = vmul.f32 %v36, %v60
  %v69 = vmul.f32 %v37, %v60
  %v70 = vld [vmem:[%s4] sm:$0xff]
  %v71 = vld [vmem:[%s4 + $0x8] sm:$0xff]
  %v72 = vld [vmem:[%s4 + $0x10] sm:$0xff]
  %v73 = vld [vmem:[%s4 + $0x18] sm:$0xff]
  %75 = vset.pattern.permute.xlu0 0
  %76 = vperm.xlu0 %75, %v70
  %v77 = vpop.permute.xlu0 %76
  %80 = vset.pattern.permute.xlu0 0
  %81 = vperm.xlu0 %80, %v71
  %v82 = vpop.permute.xlu0 %81
  %85 = vset.pattern.permute.xlu0 0
  %86 = vperm.xlu0 %85, %v72
  %v87 = vpop.permute.xlu0 %86
  %90 = vset.pattern.permute.xlu0 0
  %91 = vperm.xlu0 %90, %v73
  %v92 = vpop.permute.xlu0 %91
  %v94 = vadd.f32 %v62, %v77
  %v95 = vadd.f32 %v63, %v77
  %v96 = vadd.f32 %v64, %v82
  %v97 = vadd.f32 %v65, %v82
  %v98 = vadd.f32 %v66, %v87
  %v99 = vadd.f32 %v67, %v87
  %v100 = vadd.f32 %v68, %v92
  %v101 = vadd.f32 %v69, %v92
  %v102 = vld [vmem:[%s1] sm:$0xff]
  %v103 = vld [vmem:[%s1 + $0x8] sm:$0xff]
  %v104 = vld [vmem:[%s1 + $0x10] sm:$0xff]
  %v105 = vld [vmem:[%s1 + $0x18] sm:$0xff]
  %v106 = vld [vmem:[%s1 + $0x20] sm:$0xff]
  %v107 = vld [vmem:[%s1 + $0x28] sm:$0xff]
  %v108 = vld [vmem:[%s1 + $0x30] sm:$0xff]
  %v109 = vld [vmem:[%s1 + $0x38] sm:$0xff]
  %v110 = vadd.f32 %v94, %v102
  %v111 = vadd.f32 %v95, %v103
  %v112 = vadd.f32 %v96, %v104
  %v113 = vadd.f32 %v97, %v105
  %v114 = vadd.f32 %v98, %v106
  %v115 = vadd.f32 %v99, %v107
  %v116 = vadd.f32 %v100, %v108
  %v117 = vadd.f32 %v101, %v109
  %v118 = vld [vmem:[%s2] sm:$0xff]
  %v119 = vld [vmem:[%s2 + $0x8] sm:$0xff]
  %v120 = vld [vmem:[%s2 + $0x10] sm:$0xff]
  %v121 = vld [vmem:[%s2 + $0x18] sm:$0xff]
  %v122 = vld [vmem:[%s2 + $0x20] sm:$0xff]
  %v123 = vld [vmem:[%s2 + $0x28] sm:$0xff]
  %v124 = vld [vmem:[%s2 + $0x30] sm:$0xff]
  %v125 = vld [vmem:[%s2 + $0x38] sm:$0xff]
  %v126 = vld [vmem:[%s2 + $0x40] sm:$0xff]
  %v127 = vld [vmem:[%s2 + $0x48] sm:$0xff]
  %v128 = vld [vmem:[%s2 + $0x50] sm:$0xff]
  %v129 = vld [vmem:[%s2 + $0x58] sm:$0xff]
  %v130 = vld [vmem:[%s2 + $0x60] sm:$0xff]
  %v131 = vld [vmem:[%s2 + $0x68] sm:$0xff]
  %v132 = vld [vmem:[%s2 + $0x70] sm:$0xff]
  %v133 = vld [vmem:[%s2 + $0x78] sm:$0xff]
  %v134 = vld [vmem:[%s2 + $0x80] sm:$0xff]
  %v135 = vld [vmem:[%s2 + $0x88] sm:$0xff]
  %v136 = vld [vmem:[%s2 + $0x90] sm:$0xff]
  %v137 = vld [vmem:[%s2 + $0x98] sm:$0xff]
  %v138 = vld [vmem:[%s2 + $0xa0] sm:$0xff]
  %v139 = vld [vmem:[%s2 + $0xa8] sm:$0xff]
  %v140 = vld [vmem:[%s2 + $0xb0] sm:$0xff]
  %v141 = vld [vmem:[%s2 + $0xb8] sm:$0xff]
  %vm142 = vcmask 261120
  %v144 = vsel %vm142, %v118, 0
  %v147 = vsel %vm142, %v119, 0
  %v150 = vsel %vm142, %v120, 0
  %v153 = vsel %vm142, %v121, 0
  %v156 = vsel %vm142, %v122, 0
  %v159 = vsel %vm142, %v123, 0
  %v162 = vsel %vm142, %v124, 0
  %v165 = vsel %vm142, %v125, 0
  %v168 = vsel %vm142, %v126, 0
  %v171 = vsel %vm142, %v127, 0
  %v174 = vsel %vm142, %v128, 0
  %v177 = vsel %vm142, %v129, 0
  %v180 = vsel %vm142, %v130, 0
  %v183 = vsel %vm142, %v131, 0
  %v186 = vsel %vm142, %v132, 0
  %v189 = vsel %vm142, %v133, 0
  %v192 = vsel %vm142, %v134, 0
  %v195 = vsel %vm142, %v135, 0
  %v198 = vsel %vm142, %v136, 0
  %v201 = vsel %vm142, %v137, 0
  %v204 = vsel %vm142, %v138, 0
  %v207 = vsel %vm142, %v139, 0
  %v210 = vsel %vm142, %v140, 0
  %v213 = vsel %vm142, %v141, 0
  %215 = vmatprep.subr.mxu0 %v111
  %216 = vmatpush1.msra.mxu0 %v110
  %217 = vmatprep.subr.mxu0 %v113
  %218 = vmatpush1.msra.mxu0 %v112
  %219 = vmatprep.subr.mxu0 %v115
  %220 = vmatpush1.msra.mxu0 %v114
  %221 = vmatprep.subr.mxu0 %v117
  %222 = vmatpush1.msra.mxu0 %v116
  %223 = vmatprep.subr.mxu0 0.0
  %224 = vmatpush1.msra.mxu0 0.0
  %225 = vmatprep.subr.mxu0 0.0
  %226 = vmatpush1.msra.mxu0 0.0
  %227 = vmatprep.subr.mxu0 0.0
  %228 = vmatpush1.msra.mxu0 0.0
  %229 = vmatprep.subr.mxu0 0.0
  %230 = vmatpush1.msra.mxu0 0.0
  %231 = vmatprep.subr.mxu0 0.0
  %232 = vmatpush1.msra.mxu0 0.0
  %233 = vmatprep.subr.mxu0 0.0
  %234 = vmatpush1.msra.mxu0 0.0
  %235 = vmatprep.subr.mxu0 0.0
  %236 = vmatpush1.msra.mxu0 0.0
  %237 = vmatprep.subr.mxu0 0.0
  %238 = vmatpush1.msra.mxu0 0.0
  %239 = vmatprep.subr.mxu0 0.0
  %240 = vmatpush1.msra.mxu0 0.0
  %241 = vmatprep.subr.mxu0 0.0
  %242 = vmatpush1.msra.mxu0 0.0
  %243 = vmatprep.subr.mxu0 0.0
  %244 = vmatpush1.msra.mxu0 0.0
  %245 = vmatprep.subr.mxu0 0.0
  %246 = vmatpush1.msra.mxu0 0.0
  %247 = vmatprep.subr.mxu0 0.0
  %248 = vmatpush1.msra.mxu0 0.0
  %249 = vmatprep.subr.mxu0 0.0
  %250 = vmatpush1.msra.mxu0 0.0
  %251 = vmatprep.subr.mxu0 0.0
  %252 = vmatpush1.msra.mxu0 0.0
  %253 = vmatprep.subr.mxu0 0.0
  %254 = vmatpush1.msra.mxu0 0.0
  %255 = vmatprep.subr.mxu0 0.0
  %256 = vmatpush1.msra.mxu0 0.0
  %257 = vmatprep.subr.mxu0 0.0
  %258 = vmatpush1.msra.mxu0 0.0
  %259 = vmatprep.subr.mxu0 0.0
  %260 = vmatpush1.msra.mxu0 0.0
  %261 = vmatprep.subr.mxu0 0.0
  %262 = vmatpush1.msra.mxu0 0.0
  %263 = vmatprep.subr.mxu0 0.0
  %264 = vmatpush1.msra.mxu0 0.0
  %265 = vmatprep.subr.mxu0 0.0
  %266 = vmatpush1.msra.mxu0 0.0
  %267 = vmatprep.subr.mxu0 0.0
  %268 = vmatpush1.msra.mxu0 0.0
  %269 = vmatprep.subr.mxu0 0.0
  %270 = vmatpush1.msra.mxu0 0.0
  %271 = vmatprep.subr.mxu0 0.0
  %272 = vmatpush1.msra.mxu0 0.0
  %273 = vmatprep.subr.mxu0 0.0
  %274 = vmatpush1.msra.mxu0 0.0
  %275 = vmatprep.subr.mxu0 0.0
  %276 = vmatpush1.msra.mxu0 0.0
  %277 = vmatprep.subr.mxu0 0.0
  %278 = vmatpush1.msra.mxu0 0.0
  %279 = vmatprep.mubr.f32.mxu0 0.0
  %280 = vmatmul.mubr.f32.gmra.mrb[0].mxu0 %v144
  %v281 = vpop.f32.mrb[0].mxu0
  %v282 = vadd.f32 0.0, %v281
  %v283 = vpop.f32.mrb[0].mxu0
  %v284 = vadd.f32 0.0, %v283
  %285 = vmatprep.mubr.f32.mxu0 0.0
  %286 = vmatmul.mubr.f32.gmra.mrb[0].mxu0 %v147
  %v287 = vpop.f32.mrb[0].mxu0
  %v288 = vadd.f32 0.0, %v287
  %v289 = vpop.f32.mrb[0].mxu0
  %v290 = vadd.f32 0.0, %v289
  %291 = vmatprep.mubr.f32.mxu0 0.0
  %292 = vmatmul.mubr.f32.gmra.mrb[0].mxu0 %v150
  %v293 = vpop.f32.mrb[0].mxu0
  %v294 = vadd.f32 0.0, %v293
  %v295 = vpop.f32.mrb[0].mxu0
  %v296 = vadd.f32 0.0, %v295
  %297 = vmatprep.mubr.f32.mxu0 0.0
  %298 = vmatmul.mubr.f32.gmra.mrb[0].mxu0 %v153
  %v299 = vpop.f32.mrb[0].mxu0
  %v300 = vadd.f32 0.0, %v299
  %v301 = vpop.f32.mrb[0].mxu0
  %v302 = vadd.f32 0.0, %v301
  %303 = vmatprep.mubr.f32.mxu0 0.0
  %304 = vmatmul.mubr.f32.gmra.mrb[0].mxu0 %v156
  %v305 = vpop.f32.mrb[0].mxu0
  %v306 = vadd.f32 0.0, %v305
  %v307 = vpop.f32.mrb[0].mxu0
  %v308 = vadd.f32 0.0, %v307
  %309 = vmatprep.mubr.f32.mxu0 0.0
  %310 = vmatmul.mubr.f32.gmra.mrb[0].mxu0 %v159
  %v311 = vpop.f32.mrb[0].mxu0
  %v312 = vadd.f32 0.0, %v311
  %v313 = vpop.f32.mrb[0].mxu0
  %v314 = vadd.f32 0.0, %v313
  %315 = vmatprep.mubr.f32.mxu0 0.0
  %316 = vmatmul.mubr.f32.gmra.mrb[0].mxu0 %v162
  %v317 = vpop.f32.mrb[0].mxu0
  %v318 = vadd.f32 0.0, %v317
  %v319 = vpop.f32.mrb[0].mxu0
  %v320 = vadd.f32 0.0, %v319
  %321 = vmatprep.mubr.f32.mxu0 0.0
  %322 = vmatmul.mubr.f32.gmra.mrb[0].mxu0 %v165
  %v323 = vpop.f32.mrb[0].mxu0
  %v324 = vadd.f32 0.0, %v323
  %v325 = vpop.f32.mrb[0].mxu0
  %v326 = vadd.f32 0.0, %v325
  %327 = vmatprep.mubr.f32.mxu0 0.0
  %328 = vmatmul.mubr.f32.gmra.mrb[0].mxu0 %v168
  %v329 = vpop.f32.mrb[0].mxu0
  %v330 = vadd.f32 0.0, %v329
  %v331 = vpop.f32.mrb[0].mxu0
  %v332 = vadd.f32 0.0, %v331
  %333 = vmatprep.mubr.f32.mxu0 0.0
  %334 = vmatmul.mubr.f32.gmra.mrb[0].mxu0 %v171
  %v335 = vpop.f32.mrb[0].mxu0
  %v336 = vadd.f32 0.0, %v335
  %v337 = vpop.f32.mrb[0].mxu0
  %v338 = vadd.f32 0.0, %v337
  %339 = vmatprep.mubr.f32.mxu0 0.0
  %340 = vmatmul.mubr.f32.gmra.mrb[0].mxu0 %v174
  %v341 = vpop.f32.mrb[0].mxu0
  %v342 = vadd.f32 0.0, %v341
  %v343 = vpop.f32.mrb[0].mxu0
  %v344 = vadd.f32 0.0, %v343
  %345 = vmatprep.mubr.f32.mxu0 0.0
  %346 = vmatmul.mubr.f32.gmra.mrb[0].mxu0 %v177
  %v347 = vpop.f32.mrb[0].mxu0
  %v348 = vadd.f32 0.0, %v347
  %v349 = vpop.f32.mrb[0].mxu0
  %v350 = vadd.f32 0.0, %v349
  %351 = vmatprep.mubr.f32.mxu0 0.0
  %352 = vmatmul.mubr.f32.gmra.mrb[0].mxu0 %v180
  %v353 = vpop.f32.mrb[0].mxu0
  %v354 = vadd.f32 0.0, %v353
  %v355 = vpop.f32.mrb[0].mxu0
  %v356 = vadd.f32 0.0, %v355
  %357 = vmatprep.mubr.f32.mxu0 0.0
  %358 = vmatmul.mubr.f32.gmra.mrb[0].mxu0 %v183
  %v359 = vpop.f32.mrb[0].mxu0
  %v360 = vadd.f32 0.0, %v359
  %v361 = vpop.f32.mrb[0].mxu0
  %v362 = vadd.f32 0.0, %v361
  %363 = vmatprep.mubr.f32.mxu0 0.0
  %364 = vmatmul.mubr.f32.gmra.mrb[0].mxu0 %v186
  %v365 = vpop.f32.mrb[0].mxu0
  %v366 = vadd.f32 0.0, %v365
  %v367 = vpop.f32.mrb[0].mxu0
  %v368 = vadd.f32 0.0, %v367
  %369 = vmatprep.mubr.f32.mxu0 0.0
  %370 = vmatmul.mubr.f32.gmra.mrb[0].mxu0 %v189
  %v371 = vpop.f32.mrb[0].mxu0
  %v372 = vadd.f32 0.0, %v371
  %v373 = vpop.f32.mrb[0].mxu0
  %v374 = vadd.f32 0.0, %v373
  %375 = vmatprep.mubr.f32.mxu0 0.0
  %376 = vmatmul.mubr.f32.gmra.mrb[0].mxu0 %v192
  %v377 = vpop.f32.mrb[0].mxu0
  %v378 = vadd.f32 0.0, %v377
  %v379 = vpop.f32.mrb[0].mxu0
  %v380 = vadd.f32 0.0, %v379
  %381 = vmatprep.mubr.f32.mxu0 0.0
  %382 = vmatmul.mubr.f32.gmra.mrb[0].mxu0 %v195
  %v383 = vpop.f32.mrb[0].mxu0
  %v384 = vadd.f32 0.0, %v383
  %v385 = vpop.f32.mrb[0].mxu0
  %v386 = vadd.f32 0.0, %v385
  %387 = vmatprep.mubr.f32.mxu0 0.0
  %388 = vmatmul.mubr.f32.gmra.mrb[0].mxu0 %v198
  %v389 = vpop.f32.mrb[0].mxu0
  %v390 = vadd.f32 0.0, %v389
  %v391 = vpop.f32.mrb[0].mxu0
  %v392 = vadd.f32 0.0, %v391
  %393 = vmatprep.mubr.f32.mxu0 0.0
  %394 = vmatmul.mubr.f32.gmra.mrb[0].mxu0 %v201
  %v395 = vpop.f32.mrb[0].mxu0
  %v396 = vadd.f32 0.0, %v395
  %v397 = vpop.f32.mrb[0].mxu0
  %v398 = vadd.f32 0.0, %v397
  %399 = vmatprep.mubr.f32.mxu0 0.0
  %400 = vmatmul.mubr.f32.gmra.mrb[0].mxu0 %v204
  %v401 = vpop.f32.mrb[0].mxu0
  %v402 = vadd.f32 0.0, %v401
  %v403 = vpop.f32.mrb[0].mxu0
  %v404 = vadd.f32 0.0, %v403
  %405 = vmatprep.mubr.f32.mxu0 0.0
  %406 = vmatmul.mubr.f32.gmra.mrb[0].mxu0 %v207
  %v407 = vpop.f32.mrb[0].mxu0
  %v408 = vadd.f32 0.0, %v407
  %v409 = vpop.f32.mrb[0].mxu0
  %v410 = vadd.f32 0.0, %v409
  %411 = vmatprep.mubr.f32.mxu0 0.0
  %412 = vmatmul.mubr.f32.gmra.mrb[0].mxu0 %v210
  %v413 = vpop.f32.mrb[0].mxu0
  %v414 = vadd.f32 0.0, %v413
  %v415 = vpop.f32.mrb[0].mxu0
  %v416 = vadd.f32 0.0, %v415
  %417 = vmatprep.mubr.f32.mxu0 0.0
  %418 = vmatmul.mubr.f32.gmra.mrb[0].mxu0 %v213
  %v419 = vpop.f32.mrb[0].mxu0
  %v420 = vadd.f32 0.0, %v419
  %v421 = vpop.f32.mrb[0].mxu0
  %v422 = vadd.f32 0.0, %v421
  %423 = vdwg.mxu0
  %v424 = vld [vmem:[%s5] sm:$0xff]
  %v425 = vld [vmem:[%s5 + $0x8] sm:$0xff]
  %v426 = vld [vmem:[%s5 + $0x10] sm:$0xff]
  %v427 = vld [vmem:[%s5 + $0x18] sm:$0xff]
  %v428 = vld [vmem:[%s5 + $0x20] sm:$0xff]
  %v429 = vld [vmem:[%s5 + $0x28] sm:$0xff]
  %v430 = vld [vmem:[%s5 + $0x30] sm:$0xff]
  %v431 = vld [vmem:[%s5 + $0x38] sm:$0xff]
  %v432 = vld [vmem:[%s5 + $0x40] sm:$0xff]
  %v433 = vld [vmem:[%s5 + $0x48] sm:$0xff]
  %v434 = vld [vmem:[%s5 + $0x50] sm:$0xff]
  %v435 = vld [vmem:[%s5 + $0x58] sm:$0xff]
  %v436 = vld [vmem:[%s5 + $0x60] sm:$0xff]
  %v437 = vld [vmem:[%s5 + $0x68] sm:$0xff]
  %v438 = vld [vmem:[%s5 + $0x70] sm:$0xff]
  %v439 = vld [vmem:[%s5 + $0x78] sm:$0xff]
  %v440 = vld [vmem:[%s5 + $0x80] sm:$0xff]
  %v441 = vld [vmem:[%s5 + $0x88] sm:$0xff]
  %v442 = vld [vmem:[%s5 + $0x90] sm:$0xff]
  %v443 = vld [vmem:[%s5 + $0x98] sm:$0xff]
  %v444 = vld [vmem:[%s5 + $0xa0] sm:$0xff]
  %v445 = vld [vmem:[%s5 + $0xa8] sm:$0xff]
  %v446 = vld [vmem:[%s5 + $0xb0] sm:$0xff]
  %v447 = vld [vmem:[%s5 + $0xb8] sm:$0xff]
  %449 = vset.pattern.permute.xlu0 0
  %450 = vperm.xlu0 %449, %v424
  %v451 = vpop.permute.xlu0 %450
  %454 = vset.pattern.permute.xlu0 0
  %455 = vperm.xlu0 %454, %v425
  %v456 = vpop.permute.xlu0 %455
  %459 = vset.pattern.permute.xlu0 0
  %460 = vperm.xlu0 %459, %v426
  %v461 = vpop.permute.xlu0 %460
  %464 = vset.pattern.permute.xlu0 0
  %465 = vperm.xlu0 %464, %v427
  %v466 = vpop.permute.xlu0 %465
  %469 = vset.pattern.permute.xlu0 0
  %470 = vperm.xlu0 %469, %v428
  %v471 = vpop.permute.xlu0 %470
  %474 = vset.pattern.permute.xlu0 0
  %475 = vperm.xlu0 %474, %v429
  %v476 = vpop.permute.xlu0 %475
  %479 = vset.pattern.permute.xlu0 0
  %480 = vperm.xlu0 %479, %v430
  %v481 = vpop.permute.xlu0 %480
  %484 = vset.pattern.permute.xlu0 0
  %485 = vperm.xlu0 %484, %v431
  %v486 = vpop.permute.xlu0 %485
  %489 = vset.pattern.permute.xlu0 0
  %490 = vperm.xlu0 %489, %v432
  %v491 = vpop.permute.xlu0 %490
  %494 = vset.pattern.permute.xlu0 0
  %495 = vperm.xlu0 %494, %v433
  %v496 = vpop.permute.xlu0 %495
  %499 = vset.pattern.permute.xlu0 0
  %500 = vperm.xlu0 %499, %v434
  %v501 = vpop.permute.xlu0 %500
  %504 = vset.pattern.permute.xlu0 0
  %505 = vperm.xlu0 %504, %v435
  %v506 = vpop.permute.xlu0 %505
  %509 = vset.pattern.permute.xlu0 0
  %510 = vperm.xlu0 %509, %v436
  %v511 = vpop.permute.xlu0 %510
  %514 = vset.pattern.permute.xlu0 0
  %515 = vperm.xlu0 %514, %v437
  %v516 = vpop.permute.xlu0 %515
  %519 = vset.pattern.permute.xlu0 0
  %520 = vperm.xlu0 %519, %v438
  %v521 = vpop.permute.xlu0 %520
  %524 = vset.pattern.permute.xlu0 0
  %525 = vperm.xlu0 %524, %v439
  %v526 = vpop.permute.xlu0 %525
  %529 = vset.pattern.permute.xlu0 0
  %530 = vperm.xlu0 %529, %v440
  %v531 = vpop.permute.xlu0 %530
  %534 = vset.pattern.permute.xlu0 0
  %535 = vperm.xlu0 %534, %v441
  %v536 = vpop.permute.xlu0 %535
  %539 = vset.pattern.permute.xlu0 0
  %540 = vperm.xlu0 %539, %v442
  %v541 = vpop.permute.xlu0 %540
  %544 = vset.pattern.permute.xlu0 0
  %545 = vperm.xlu0 %544, %v443
  %v546 = vpop.permute.xlu0 %545
  %549 = vset.pattern.permute.xlu0 0
  %550 = vperm.xlu0 %549, %v444
  %v551 = vpop.permute.xlu0 %550
  %554 = vset.pattern.permute.xlu0 0
  %555 = vperm.xlu0 %554, %v445
  %v556 = vpop.permute.xlu0 %555
  %559 = vset.pattern.permute.xlu0 0
  %560 = vperm.xlu0 %559, %v446
  %v561 = vpop.permute.xlu0 %560
  %564 = vset.pattern.permute.xlu0 0
  %565 = vperm.xlu0 %564, %v447
  %v566 = vpop.permute.xlu0 %565
  %v568 = vmul.f32 %v282, %v451
  %v569 = vmul.f32 %v284, %v451
  %v570 = vmul.f32 %v288, %v456
  %v571 = vmul.f32 %v290, %v456
  %v572 = vmul.f32 %v294, %v461
  %v573 = vmul.f32 %v296, %v461
  %v574 = vmul.f32 %v300, %v466
  %v575 = vmul.f32 %v302, %v466
  %v576 = vmul.f32 %v306, %v471
  %v577 = vmul.f32 %v308, %v471
  %v578 = vmul.f32 %v312, %v476
  %v579 = vmul.f32 %v314, %v476
  %v580 = vmul.f32 %v318, %v481
  %v581 = vmul.f32 %v320, %v481
  %v582 = vmul.f32 %v324, %v486
  %v583 = vmul.f32 %v326, %v486
  %v584 = vmul.f32 %v330, %v491
  %v585 = vmul.f32 %v332, %v491
  %v586 = vmul.f32 %v336, %v496
  %v587 = vmul.f32 %v338, %v496
  %v588 = vmul.f32 %v342, %v501
  %v589 = vmul.f32 %v344, %v501
  %v590 = vmul.f32 %v348, %v506
  %v591 = vmul.f32 %v350, %v506
  %v592 = vmul.f32 %v354, %v511
  %v593 = vmul.f32 %v356, %v511
  %v594 = vmul.f32 %v360, %v516
  %v595 = vmul.f32 %v362, %v516
  %v596 = vmul.f32 %v366, %v521
  %v597 = vmul.f32 %v368, %v521
  %v598 = vmul.f32 %v372, %v526
  %v599 = vmul.f32 %v374, %v526
  %v600 = vmul.f32 %v378, %v531
  %v601 = vmul.f32 %v380, %v531
  %v602 = vmul.f32 %v384, %v536
  %v603 = vmul.f32 %v386, %v536
  %v604 = vmul.f32 %v390, %v541
  %v605 = vmul.f32 %v392, %v541
  %v606 = vmul.f32 %v396, %v546
  %v607 = vmul.f32 %v398, %v546
  %v608 = vmul.f32 %v402, %v551
  %v609 = vmul.f32 %v404, %v551
  %v610 = vmul.f32 %v408, %v556
  %v611 = vmul.f32 %v410, %v556
  %v612 = vmul.f32 %v414, %v561
  %v613 = vmul.f32 %v416, %v561
  %v614 = vmul.f32 %v420, %v566
  %v615 = vmul.f32 %v422, %v566
  %v616 = vld [vmem:[%s6] sm:$0xff]
  %v617 = vld [vmem:[%s6 + $0x8] sm:$0xff]
  %v618 = vld [vmem:[%s6 + $0x10] sm:$0xff]
  %v619 = vld [vmem:[%s6 + $0x18] sm:$0xff]
  %v620 = vld [vmem:[%s6 + $0x20] sm:$0xff]
  %v621 = vld [vmem:[%s6 + $0x28] sm:$0xff]
  %v622 = vld [vmem:[%s6 + $0x30] sm:$0xff]
  %v623 = vld [vmem:[%s6 + $0x38] sm:$0xff]
  %v624 = vld [vmem:[%s6 + $0x40] sm:$0xff]
  %v625 = vld [vmem:[%s6 + $0x48] sm:$0xff]
  %v626 = vld [vmem:[%s6 + $0x50] sm:$0xff]
  %v627 = vld [vmem:[%s6 + $0x58] sm:$0xff]
  %v628 = vld [vmem:[%s6 + $0x60] sm:$0xff]
  %v629 = vld [vmem:[%s6 + $0x68] sm:$0xff]
  %v630 = vld [vmem:[%s6 + $0x70] sm:$0xff]
  %v631 = vld [vmem:[%s6 + $0x78] sm:$0xff]
  %v632 = vld [vmem:[%s6 + $0x80] sm:$0xff]
  %v633 = vld [vmem:[%s6 + $0x88] sm:$0xff]
  %v634 = vld [vmem:[%s6 + $0x90] sm:$0xff]
  %v635 = vld [vmem:[%s6 + $0x98] sm:$0xff]
  %v636 = vld [vmem:[%s6 + $0xa0] sm:$0xff]
  %v637 = vld [vmem:[%s6 + $0xa8] sm:$0xff]
  %v638 = vld [vmem:[%s6 + $0xb0] sm:$0xff]
  %v639 = vld [vmem:[%s6 + $0xb8] sm:$0xff]
  %641 = vset.pattern.permute.xlu0 0
  %642 = vperm.xlu0 %641, %v616
  %v643 = vpop.permute.xlu0 %642
  %646 = vset.pattern.permute.xlu0 0
  %647 = vperm.xlu0 %646, %v617
  %v648 = vpop.permute.xlu0 %647
  %651 = vset.pattern.permute.xlu0 0
  %652 = vperm.xlu0 %651, %v618
  %v653 = vpop.permute.xlu0 %652
  %656 = vset.pattern.permute.xlu0 0
  %657 = vperm.xlu0 %656, %v619
  %v658 = vpop.permute.xlu0 %657
  %661 = vset.pattern.permute.xlu0 0
  %662 = vperm.xlu0 %661, %v620
  %v663 = vpop.permute.xlu0 %662
  %666 = vset.pattern.permute.xlu0 0
  %667 = vperm.xlu0 %666, %v621
  %v668 = vpop.permute.xlu0 %667
  %671 = vset.pattern.permute.xlu0 0
  %672 = vperm.xlu0 %671, %v622
  %v673 = vpop.permute.xlu0 %672
  %676 = vset.pattern.permute.xlu0 0
  %677 = vperm.xlu0 %676, %v623
  %v678 = vpop.permute.xlu0 %677
  %681 = vset.pattern.permute.xlu0 0
  %682 = vperm.xlu0 %681, %v624
  %v683 = vpop.permute.xlu0 %682
  %686 = vset.pattern.permute.xlu0 0
  %687 = vperm.xlu0 %686, %v625
  %v688 = vpop.permute.xlu0 %687
  %691 = vset.pattern.permute.xlu0 0
  %692 = vperm.xlu0 %691, %v626
  %v693 = vpop.permute.xlu0 %692
  %696 = vset.pattern.permute.xlu0 0
  %697 = vperm.xlu0 %696, %v627
  %v698 = vpop.permute.xlu0 %697
  %701 = vset.pattern.permute.xlu0 0
  %702 = vperm.xlu0 %701, %v628
  %v703 = vpop.permute.xlu0 %702
  %706 = vset.pattern.permute.xlu0 0
  %707 = vperm.xlu0 %706, %v629
  %v708 = vpop.permute.xlu0 %707
  %711 = vset.pattern.permute.xlu0 0
  %712 = vperm.xlu0 %711, %v630
  %v713 = vpop.permute.xlu0 %712
  %716 = vset.pattern.permute.xlu0 0
  %717 = vperm.xlu0 %716, %v631
  %v718 = vpop.permute.xlu0 %717
  %721 = vset.pattern.permute.xlu0 0
  %722 = vperm.xlu0 %721, %v632
  %v723 = vpop.permute.xlu0 %722
  %726 = vset.pattern.permute.xlu0 0
  %727 = vperm.xlu0 %726, %v633
  %v728 = vpop.permute.xlu0 %727
  %731 = vset.pattern.permute.xlu0 0
  %732 = vperm.xlu0 %731, %v634
  %v733 = vpop.permute.xlu0 %732
  %736 = vset.pattern.permute.xlu0 0
  %737 = vperm.xlu0 %736, %v635
  %v738 = vpop.permute.xlu0 %737
  %741 = vset.pattern.permute.xlu0 0
  %742 = vperm.xlu0 %741, %v636
  %v743 = vpop.permute.xlu0 %742
  %746 = vset.pattern.permute.xlu0 0
  %747 = vperm.xlu0 %746, %v637
  %v748 = vpop.permute.xlu0 %747
  %751 = vset.pattern.permute.xlu0 0
  %752 = vperm.xlu0 %751, %v638
  %v753 = vpop.permute.xlu0 %752
  %756 = vset.pattern.permute.xlu0 0
  %757 = vperm.xlu0 %756, %v639
  %v758 = vpop.permute.xlu0 %757
  %v760 = vadd.f32 %v568, %v643
  %v761 = vadd.f32 %v569, %v643
  %v762 = vadd.f32 %v570, %v648
  %v763 = vadd.f32 %v571, %v648
  %v764 = vadd.f32 %v572, %v653
  %v765 = vadd.f32 %v573, %v653
  %v766 = vadd.f32 %v574, %v658
  %v767 = vadd.f32 %v575, %v658
  %v768 = vadd.f32 %v576, %v663
  %v769 = vadd.f32 %v577, %v663
  %v770 = vadd.f32 %v578, %v668
  %v771 = vadd.f32 %v579, %v668
  %v772 = vadd.f32 %v580, %v673
  %v773 = vadd.f32 %v581, %v673
  %v774 = vadd.f32 %v582, %v678
  %v775 = vadd.f32 %v583, %v678
  %v776 = vadd.f32 %v584, %v683
  %v777 = vadd.f32 %v585, %v683
  %v778 = vadd.f32 %v586, %v688
  %v779 = vadd.f32 %v587, %v688
  %v780 = vadd.f32 %v588, %v693
  %v781 = vadd.f32 %v589, %v693
  %v782 = vadd.f32 %v590, %v698
  %v783 = vadd.f32 %v591, %v698
  %v784 = vadd.f32 %v592, %v703
  %v785 = vadd.f32 %v593, %v703
  %v786 = vadd.f32 %v594, %v708
  %v787 = vadd.f32 %v595, %v708
  %v788 = vadd.f32 %v596, %v713
  %v789 = vadd.f32 %v597, %v713
  %v790 = vadd.f32 %v598, %v718
  %v791 = vadd.f32 %v599, %v718
  %v792 = vadd.f32 %v600, %v723
  %v793 = vadd.f32 %v601, %v723
  %v794 = vadd.f32 %v602, %v728
  %v795 = vadd.f32 %v603, %v728
  %v796 = vadd.f32 %v604, %v733
  %v797 = vadd.f32 %v605, %v733
  %v798 = vadd.f32 %v606, %v738
  %v799 = vadd.f32 %v607, %v738
  %v800 = vadd.f32 %v608, %v743
  %v801 = vadd.f32 %v609, %v743
  %v802 = vadd.f32 %v610, %v748
  %v803 = vadd.f32 %v611, %v748
  %v804 = vadd.f32 %v612, %v753
  %v805 = vadd.f32 %v613, %v753
  %v806 = vadd.f32 %v614, %v758
  %v807 = vadd.f32 %v615, %v758
  %808 = vst [vmem:[%s7] sm:$0xff] %v760
  %vm809 = vcmask 523264
  %810 = vst.msk [vmem:[%s7 + $0x8] sm:$0xff] %vm809, %v761
  %811 = vst [vmem:[%s7 + $0x10] sm:$0xff] %v762
  %812 = vst.msk [vmem:[%s7 + $0x18] sm:$0xff] %vm809, %v763
  %813 = vst [vmem:[%s7 + $0x20] sm:$0xff] %v764
  %814 = vst.msk [vmem:[%s7 + $0x28] sm:$0xff] %vm809, %v765
  %815 = vst [vmem:[%s7 + $0x30] sm:$0xff] %v766
  %816 = vst.msk [vmem:[%s7 + $0x38] sm:$0xff] %vm809, %v767
  %817 = vst [vmem:[%s7 + $0x40] sm:$0xff] %v768
  %818 = vst.msk [vmem:[%s7 + $0x48] sm:$0xff] %vm809, %v769
  %819 = vst [vmem:[%s7 + $0x50] sm:$0xff] %v770
  %820 = vst.msk [vmem:[%s7 + $0x58] sm:$0xff] %vm809, %v771
  %821 = vst [vmem:[%s7 + $0x60] sm:$0xff] %v772
  %822 = vst.msk [vmem:[%s7 + $0x68] sm:$0xff] %vm809, %v773
  %823 = vst [vmem:[%s7 + $0x70] sm:$0xff] %v774
  %824 = vst.msk [vmem:[%s7 + $0x78] sm:$0xff] %vm809, %v775
  %825 = vst [vmem:[%s7 + $0x80] sm:$0xff] %v776
  %826 = vst.msk [vmem:[%s7 + $0x88] sm:$0xff] %vm809, %v777
  %827 = vst [vmem:[%s7 + $0x90] sm:$0xff] %v778
  %828 = vst.msk [vmem:[%s7 + $0x98] sm:$0xff] %vm809, %v779
  %829 = vst [vmem:[%s7 + $0xa0] sm:$0xff] %v780
  %830 = vst.msk [vmem:[%s7 + $0xa8] sm:$0xff] %vm809, %v781
  %831 = vst [vmem:[%s7 + $0xb0] sm:$0xff] %v782
  %832 = vst.msk [vmem:[%s7 + $0xb8] sm:$0xff] %vm809, %v783
  %833 = vst [vmem:[%s7 + $0xc0] sm:$0xff] %v784
  %834 = vst.msk [vmem:[%s7 + $0xc8] sm:$0xff] %vm809, %v785
  %835 = vst [vmem:[%s7 + $0xd0] sm:$0xff] %v786
  %836 = vst.msk [vmem:[%s7 + $0xd8] sm:$0xff] %vm809, %v787
  %837 = vst [vmem:[%s7 + $0xe0] sm:$0xff] %v788
  %838 = vst.msk [vmem:[%s7 + $0xe8] sm:$0xff] %vm809, %v789
  %839 = vst [vmem:[%s7 + $0xf0] sm:$0xff] %v790
  %840 = vst.msk [vmem:[%s7 + $0xf8] sm:$0xff] %vm809, %v791
  %841 = vst [vmem:[%s7 + $0x100] sm:$0xff] %v792
  %842 = vst.msk [vmem:[%s7 + $0x108] sm:$0xff] %vm809, %v793
  %843 = vst [vmem:[%s7 + $0x110] sm:$0xff] %v794
  %844 = vst.msk [vmem:[%s7 + $0x118] sm:$0xff] %vm809, %v795
  %845 = vst [vmem:[%s7 + $0x120] sm:$0xff] %v796
  %846 = vst.msk [vmem:[%s7 + $0x128] sm:$0xff] %vm809, %v797
  %847 = vst [vmem:[%s7 + $0x130] sm:$0xff] %v798
  %848 = vst.msk [vmem:[%s7 + $0x138] sm:$0xff] %vm809, %v799
  %849 = vst [vmem:[%s7 + $0x140] sm:$0xff] %v800
  %850 = vst.msk [vmem:[%s7 + $0x148] sm:$0xff] %vm809, %v801
  %851 = vst [vmem:[%s7 + $0x150] sm:$0xff] %v802
  %852 = vst.msk [vmem:[%s7 + $0x158] sm:$0xff] %vm809, %v803
  %853 = vst [vmem:[%s7 + $0x160] sm:$0xff] %v804
  %854 = vst.msk [vmem:[%s7 + $0x168] sm:$0xff] %vm809, %v805
  %855 = vst [vmem:[%s7 + $0x170] sm:$0xff] %v806
  %856 = vst.msk [vmem:[%s7 + $0x178] sm:$0xff] %vm809, %v807
  // Predicated region
  $region30: #{fused_forward.3} parent=0 // pred_check
    _
  $region31: #{fused_forward.3} parent=0 // pred_check_branch
    %858 = sbr.rel (0) target = $region33
  $region32: #{fused_forward.3} parent=0 // pred_region
    _
  $region33: #{fused_forward.3} parent=0 // pred_fallthru
    _
  // Predicated region
  $region34: #{fused_forward.3} parent=0 // pred_check
    _
  $region35: #{fused_forward.3} parent=0 // pred_check_branch
    %860 = sbr.rel (0) target = $region37
  $region36: #{fused_forward.3} parent=0 // pred_region
    _
  $region37: #{fused_forward.3} parent=0 // pred_fallthru
    _

</llo_original>
